<compile_context>
chip_gen: v7x
topology: tpu7x:2x2x1
jax: 0.10.0
libtpu: 0.0.40
codegen_flags: <defaults>
</compile_context>

<pallas_src>
import jax
import jax.numpy as jnp
from jax.experimental import pallas as pl
from jax.experimental.pallas import tpu as pltpu

NUM_GCN_LAYERS = 4      # CFG.num_gcn_layers
LN_EPS = 1e-5           # torch.nn.LayerNorm default eps


def telomere_gene_kernel(adj_ref, x_ref, w0_ref, wr_ref, ln_ref, len_ref, out_ref):
    """One graph per grid step.

    adj_ref: [1, N, N]  bf16   normalized adjacency
    x_ref:   [1, N, F]  bf16   node features
    w0_ref:  [F, H]     bf16   layer-0 GCN weight
    wr_ref:  [L-1, H, H] bf16  GCN weights for layers 1..L-1
    ln_ref:  [L, 3, H]  f32    per layer: row0 GCN bias, row1 LN gamma, row2 LN beta
    len_ref: [1, 1]     f32    telomere length (SMEM scalar)
    out_ref: [1, 1, H]  f32    mean-pooled, length-scaled output
    """
    n = adj_ref.shape[1]
    f_in = x_ref.shape[2]
    hdim = w0_ref.shape[1]

    adj = adj_ref[0]                         # [N, N] bf16
    x = x_ref[0]                             # [N, F] bf16

    def layer_norm_relu(h, lnl):
        # h [N, H] f32 (post-aggregation, pre-bias); lnl [3, H] f32
        h = h + lnl[0:1, :]                  # GCNConv bias
        mu = jnp.mean(h, axis=-1, keepdims=True)
        var = jnp.mean((h - mu) ** 2, axis=-1, keepdims=True)
        h = (h - mu) * jax.lax.rsqrt(var + LN_EPS)
        h = h * lnl[1:2, :] + lnl[2:3, :]    # LN affine
        return jnp.maximum(h, 0.0)           # ReLU

    # ---- Layer 0 (F_in -> H) --------------------------------------------
    w0 = w0_ref[...]
    if f_in < hdim:
        # (adj @ x) @ W0 : the N^2 matmul contracts over the narrower F_in.
        ax = jnp.dot(adj, x, preferred_element_type=jnp.float32)          # [N, F]
        h = jnp.dot(ax.astype(jnp.bfloat16), w0,
                    preferred_element_type=jnp.float32)                   # [N, H]
    else:
        xw = jnp.dot(x, w0, preferred_element_type=jnp.float32)
        h = jnp.dot(adj, xw.astype(jnp.bfloat16),
                    preferred_element_type=jnp.float32)
    h = layer_norm_relu(h, ln_ref[0])

    # ---- Layers 1..L-1 (H -> H), statically unrolled ---------------------
    for l in range(1, NUM_GCN_LAYERS):
        w = wr_ref[l - 1]                                                  # [H, H] bf16
        xw = jnp.dot(h.astype(jnp.bfloat16), w,
                     preferred_element_type=jnp.float32)
        h = jnp.dot(adj, xw.astype(jnp.bfloat16),
                    preferred_element_type=jnp.float32)
        h = layer_norm_relu(h, ln_ref[l])

    # is_inverted is False at init -> no negation.
    # batch=None path: mean over nodes (keepdim) then * telomere length,
    # folded into one scale: sum * (length / N).
    scale = len_ref[0, 0] * (1.0 / n)
    pooled = jnp.sum(h, axis=0, keepdims=True) * scale                     # [1, H]
    out_ref[0] = pooled.astype(out_ref.dtype)


def build_gcn_adj(edge_index, num_nodes):
    """Dense D^{-1/2}(A+I)D^{-1/2} from edge_index [2, E] (src -> dst)."""
    src = edge_index[0]
    dst = edge_index[1]
    a = jnp.zeros((num_nodes, num_nodes), jnp.float32)
    a = a.at[dst, src].add(1.0)                         # message flows source -> target
    a = a + jnp.eye(num_nodes, dtype=jnp.float32)       # self loops
    deg = jnp.sum(a, axis=1)
    dinv = jnp.where(deg > 0, jax.lax.rsqrt(deg), 0.0)
    return dinv[:, None] * a * dinv[None, :]


def init_params(key, feature_dim, hidden_dim, num_layers=NUM_GCN_LAYERS):
    """Synthetic deterministic init.

    Glorot-uniform GCN weights (PyTorch-geometric style). Bias / gamma / beta get
    small random perturbations around the PyTorch defaults (0 / 1 / 0) so the
    self-test actually exercises those code paths.
    """
    k0, kr, kln = jax.random.split(key, 3)

    def glorot(k, fan_in, fan_out):
        lim = (6.0 / (fan_in + fan_out)) ** 0.5
        return jax.random.uniform(k, (fan_in, fan_out), jnp.float32, -lim, lim)

    l1 = num_layers - 1
    wr_keys = jax.random.split(kr, l1)
    kb, kg, kbe = jax.random.split(kln, 3)
    ln = jnp.stack([
        0.1 * jax.random.normal(kb, (num_layers, hidden_dim), jnp.float32),        # GCN bias
        1.0 + 0.1 * jax.random.normal(kg, (num_layers, hidden_dim), jnp.float32),  # LN gamma
        0.1 * jax.random.normal(kbe, (num_layers, hidden_dim), jnp.float32),       # LN beta
    ], axis=1)                                                                     # [L, 3, H]
    return dict(
        w0=glorot(k0, feature_dim, hidden_dim),
        wr=jnp.stack([glorot(wr_keys[i], hidden_dim, hidden_dim) for i in range(l1)]),
        ln=ln,
    )


def telomere_gene_forward(x, edge_index, params, length=1.0):
    """Batched forward. x: [B, N, F], edge_index: [B, 2, E] -> [B, 1, H]."""
    bsz, n, f = x.shape
    hdim = params["w0"].shape[1]
    l1 = NUM_GCN_LAYERS - 1

    adj = jax.vmap(build_gcn_adj, in_axes=(0, None))(edge_index, n)   # [B, N, N]
    length_arr = jnp.array([[length]], dtype=jnp.float32)

    # bf16 MXU operands (halves HBM/VMEM traffic too); f32 accumulate in-kernel.
    adj_bf = adj.astype(jnp.bfloat16)
    x_bf = x.astype(jnp.bfloat16)
    w0_bf = params["w0"].astype(jnp.bfloat16)
    wr_bf = params["wr"].astype(jnp.bfloat16)

    in_specs = [
        pl.BlockSpec((1, n, n), lambda b: (b, 0, 0)),              # adj (per graph)
        pl.BlockSpec((1, n, f), lambda b: (b, 0, 0)),              # x (per graph)
        pl.BlockSpec((f, hdim), lambda b: (0, 0)),                 # w0 (shared)
        pl.BlockSpec((l1, hdim, hdim), lambda b: (0, 0, 0)),       # wr (shared)
        pl.BlockSpec((NUM_GCN_LAYERS, 3, hdim), lambda b: (0, 0, 0)),  # bias/gamma/beta
        pl.BlockSpec(memory_space=pltpu.MemorySpace.SMEM),         # telomere length
    ]
    return pl.pallas_call(
        telomere_gene_kernel,
        out_shape=jax.ShapeDtypeStruct((bsz, 1, hdim), jnp.float32),
        grid=(bsz,),
        in_specs=in_specs,
        out_specs=pl.BlockSpec((1, 1, hdim), lambda b: (b, 0, 0)),
        compiler_params=pltpu.CompilerParams(
            dimension_semantics=("parallel",)),
    )(adj_bf, x_bf, w0_bf, wr_bf, params["ln"], length_arr)


def telomere_gene_reference(x, adj, params, length, matmul_dtype=jnp.float32):
    """Plain-JAX single-graph reference (matmul operand dtype configurable)."""
    h = x.astype(jnp.float32)
    ws = [params["w0"]] + [params["wr"][i] for i in range(NUM_GCN_LAYERS - 1)]
    ln = params["ln"]
    adj_m = adj.astype(matmul_dtype)
    for l in range(NUM_GCN_LAYERS):
        w = ws[l].astype(matmul_dtype)
        xw = jnp.dot(h.astype(matmul_dtype), w, preferred_element_type=jnp.float32)
        h = jnp.dot(adj_m, xw.astype(matmul_dtype), preferred_element_type=jnp.float32)
        h = h + ln[l, 0]
        mu = jnp.mean(h, axis=-1, keepdims=True)
        var = jnp.mean((h - mu) ** 2, axis=-1, keepdims=True)
        h = (h - mu) * jax.lax.rsqrt(var + LN_EPS)
        h = h * ln[l, 1] + ln[l, 2]
        h = jnp.maximum(h, 0.0)
    return jnp.mean(h, axis=0, keepdims=True) * length


if __name__ == "__main__":
    key = jax.random.PRNGKey(0)
    k_x, k_e, k_p = jax.random.split(key, 3)

    # B graphs per call, lane-dense H=128, MXU-height N=128 nodes per graph.
    batch, num_nodes, feature_dim, hidden_dim, num_edges = 4, 128, 32, 128, 256
    x = jax.random.normal(k_x, (batch, num_nodes, feature_dim), jnp.float32)
    edge_index = jax.random.randint(k_e, (batch, 2, num_edges), 0, num_nodes, jnp.int32)

    params = init_params(k_p, feature_dim, hidden_dim)
    telomere_length = 0.85   # init is 1.0; use a decayed value to exercise the scale

    out = telomere_gene_forward(x, edge_index, params, telomere_length)
    out = jax.block_until_ready(out)
    assert out.shape == (batch, 1, hidden_dim)

    adj_all = jax.vmap(build_gcn_adj, in_axes=(0, None))(edge_index, num_nodes)
    for b in range(batch):
        # Tight check vs a bf16-operand reference (same MXU dtype as the kernel).
        ref_bf16 = telomere_gene_reference(x[b], adj_all[b], params,
                                           telomere_length, jnp.bfloat16)
        assert jnp.allclose(out[b], ref_bf16, atol=1e-2, rtol=1e-2), \
            "mismatch vs bf16-operand reference"
        # Loose check vs the full-f32 reference (guards bf16-cast regressions).
        ref_f32 = telomere_gene_reference(x[b], adj_all[b], params,
                                          telomere_length, jnp.float32)
        assert jnp.allclose(out[b], ref_f32, atol=5e-2, rtol=5e-2), \
            "mismatch vs f32 reference"

    print("KERNEL_OK")
</pallas_src>

<mosaic_0001>
module attributes {stable_mosaic.version = 11 : i64} {
  func.func @telomere_gene_kernel(%arg0: i32, %arg1: memref<1x128x128xbf16, #tpu.memory_space<vmem>>, %arg2: memref<1x128x32xbf16, #tpu.memory_space<vmem>>, %arg3: memref<32x128xbf16, #tpu.memory_space<vmem>>, %arg4: memref<3x128x128xbf16, #tpu.memory_space<vmem>>, %arg5: memref<4x3x128xf32, #tpu.memory_space<vmem>>, %arg6: memref<1x1xf32, #tpu.memory_space<smem>>, %arg7: memref<1x1x128xf32, #tpu.memory_space<vmem>>) attributes {dimension_semantics = [#tpu.dimension_semantics<parallel>], iteration_bounds = array<i64: 4>, scalar_prefetch = 0 : i64, scratch_operands = 0 : i64, tpu.core_type = #tpu.core_type<tc>, window_params = [{transform_indices = @transform_0, window_bounds = array<i64: 1, 128, 128>}, {transform_indices = @transform_1, window_bounds = array<i64: 1, 128, 32>}, {pipeline_mode = #tpu.pipeline_mode<synchronous>, transform_indices = @transform_2, window_bounds = array<i64: 32, 128>}, {pipeline_mode = #tpu.pipeline_mode<synchronous>, transform_indices = @transform_3, window_bounds = array<i64: 3, 128, 128>}, {pipeline_mode = #tpu.pipeline_mode<synchronous>, transform_indices = @transform_4, window_bounds = array<i64: 4, 3, 128>}, {transform_indices = @transform_5, window_bounds = array<i64: 1, 1>}, {transform_indices = @transform_6, window_bounds = array<i64: 1, 1, 128>}]} {
    %c0 = arith.constant 0 : index
    %c0_0 = arith.constant 0 : index
    %c0_1 = arith.constant 0 : index
    %0 = vector.load %arg1[%c0, %c0_0, %c0_1] : memref<1x128x128xbf16, #tpu.memory_space<vmem>>, vector<1x128x128xbf16>
    %1 = vector.shape_cast %0 : vector<1x128x128xbf16> to vector<128x128xbf16>
    %c0_2 = arith.constant 0 : index
    %c0_3 = arith.constant 0 : index
    %c0_4 = arith.constant 0 : index
    %2 = vector.load %arg2[%c0_2, %c0_3, %c0_4] : memref<1x128x32xbf16, #tpu.memory_space<vmem>>, vector<1x128x32xbf16>
    %3 = vector.shape_cast %2 : vector<1x128x32xbf16> to vector<128x32xbf16>
    %c0_5 = arith.constant 0 : index
    %c0_6 = arith.constant 0 : index
    %4 = vector.load %arg3[%c0_5, %c0_6] : memref<32x128xbf16, #tpu.memory_space<vmem>>, vector<32x128xbf16>
    %cst = arith.constant dense<0.000000e+00> : vector<128x32xf32>
    %5 = tpu.matmul %1, %3, %cst {dimension_numbers = #tpu.dot_dimension_numbers<[1], [0], [0], [1], [0, 0, 1, 1], [], []>} : vector<128x128xbf16>, vector<128x32xbf16>, vector<128x32xf32> -> vector<128x32xf32>
    %6 = arith.truncf %5 : vector<128x32xf32> to vector<128x32xbf16>
    %cst_7 = arith.constant dense<0.000000e+00> : vector<128x128xf32>
    %7 = tpu.matmul %6, %4, %cst_7 {dimension_numbers = #tpu.dot_dimension_numbers<[1], [0], [0], [1], [0, 0, 1, 1], [], []>} : vector<128x32xbf16>, vector<32x128xbf16>, vector<128x128xf32> -> vector<128x128xf32>
    %c0_8 = arith.constant 0 : index
    %c0_9 = arith.constant 0 : index
    %c0_10 = arith.constant 0 : index
    %8 = vector.load %arg5[%c0_8, %c0_9, %c0_10] : memref<4x3x128xf32, #tpu.memory_space<vmem>>, vector<1x3x128xf32>
    %9 = vector.shape_cast %8 : vector<1x3x128xf32> to vector<3x128xf32>
    %10 = vector.extract_strided_slice %9 {offsets = [0, 0], sizes = [1, 128], strides = [1, 1]} : vector<3x128xf32> to vector<1x128xf32>
    %11 = vector.broadcast %10 : vector<1x128xf32> to vector<128x128xf32>
    %12 = arith.addf %7, %11 : vector<128x128xf32>
    %cst_11 = arith.constant dense<0.000000e+00> : vector<128xf32>
    %13 = vector.multi_reduction <add>, %12, %cst_11 [1] : vector<128x128xf32> to vector<128xf32>
    %14 = vector.shape_cast %13 : vector<128xf32> to vector<128x1xf32>
    %cst_12 = arith.constant 1.280000e+02 : f32
    %15 = vector.broadcast %cst_12 : f32 to vector<128x1xf32>
    %16 = arith.divf %14, %15 : vector<128x1xf32>
    %17 = vector.broadcast %16 : vector<128x1xf32> to vector<128x128xf32>
    %18 = arith.subf %12, %17 : vector<128x128xf32>
    %19 = arith.mulf %18, %18 : vector<128x128xf32>
    %cst_13 = arith.constant dense<0.000000e+00> : vector<128xf32>
    %20 = vector.multi_reduction <add>, %19, %cst_13 [1] : vector<128x128xf32> to vector<128xf32>
    %21 = vector.shape_cast %20 : vector<128xf32> to vector<128x1xf32>
    %cst_14 = arith.constant 1.280000e+02 : f32
    %22 = vector.broadcast %cst_14 : f32 to vector<128x1xf32>
    %23 = arith.divf %21, %22 : vector<128x1xf32>
    %24 = vector.broadcast %16 : vector<128x1xf32> to vector<128x128xf32>
    %25 = arith.subf %12, %24 : vector<128x128xf32>
    %cst_15 = arith.constant 9.99999974E-6 : f32
    %26 = vector.broadcast %cst_15 : f32 to vector<128x1xf32>
    %27 = arith.addf %23, %26 : vector<128x1xf32>
    %28 = math.rsqrt %27 : vector<128x1xf32>
    %29 = vector.broadcast %28 : vector<128x1xf32> to vector<128x128xf32>
    %30 = arith.mulf %25, %29 : vector<128x128xf32>
    %31 = vector.extract_strided_slice %9 {offsets = [1, 0], sizes = [1, 128], strides = [1, 1]} : vector<3x128xf32> to vector<1x128xf32>
    %32 = vector.broadcast %31 : vector<1x128xf32> to vector<128x128xf32>
    %33 = arith.mulf %30, %32 : vector<128x128xf32>
    %34 = vector.extract_strided_slice %9 {offsets = [2, 0], sizes = [1, 128], strides = [1, 1]} : vector<3x128xf32> to vector<1x128xf32>
    %35 = vector.broadcast %34 : vector<1x128xf32> to vector<128x128xf32>
    %36 = arith.addf %33, %35 : vector<128x128xf32>
    %cst_16 = arith.constant 0.000000e+00 : f32
    %37 = vector.broadcast %cst_16 : f32 to vector<128x128xf32>
    %38 = arith.maximumf %36, %37 : vector<128x128xf32>
    %c0_17 = arith.constant 0 : index
    %c0_18 = arith.constant 0 : index
    %c0_19 = arith.constant 0 : index
    %39 = vector.load %arg4[%c0_17, %c0_18, %c0_19] : memref<3x128x128xbf16, #tpu.memory_space<vmem>>, vector<1x128x128xbf16>
    %40 = vector.shape_cast %39 : vector<1x128x128xbf16> to vector<128x128xbf16>
    %41 = arith.truncf %38 : vector<128x128xf32> to vector<128x128xbf16>
    %cst_20 = arith.constant dense<0.000000e+00> : vector<128x128xf32>
    %42 = tpu.matmul %41, %40, %cst_20 {dimension_numbers = #tpu.dot_dimension_numbers<[1], [0], [0], [1], [0, 0, 1, 1], [], []>} : vector<128x128xbf16>, vector<128x128xbf16>, vector<128x128xf32> -> vector<128x128xf32>
    %43 = arith.truncf %42 : vector<128x128xf32> to vector<128x128xbf16>
    %cst_21 = arith.constant dense<0.000000e+00> : vector<128x128xf32>
    %44 = tpu.matmul %1, %43, %cst_21 {dimension_numbers = #tpu.dot_dimension_numbers<[1], [0], [0], [1], [0, 0, 1, 1], [], []>} : vector<128x128xbf16>, vector<128x128xbf16>, vector<128x128xf32> -> vector<128x128xf32>
    %c1 = arith.constant 1 : index
    %c0_22 = arith.constant 0 : index
    %c0_23 = arith.constant 0 : index
    %45 = vector.load %arg5[%c1, %c0_22, %c0_23] : memref<4x3x128xf32, #tpu.memory_space<vmem>>, vector<1x3x128xf32>
    %46 = vector.shape_cast %45 : vector<1x3x128xf32> to vector<3x128xf32>
    %47 = vector.extract_strided_slice %46 {offsets = [0, 0], sizes = [1, 128], strides = [1, 1]} : vector<3x128xf32> to vector<1x128xf32>
    %48 = vector.broadcast %47 : vector<1x128xf32> to vector<128x128xf32>
    %49 = arith.addf %44, %48 : vector<128x128xf32>
    %cst_24 = arith.constant dense<0.000000e+00> : vector<128xf32>
    %50 = vector.multi_reduction <add>, %49, %cst_24 [1] : vector<128x128xf32> to vector<128xf32>
    %51 = vector.shape_cast %50 : vector<128xf32> to vector<128x1xf32>
    %cst_25 = arith.constant 1.280000e+02 : f32
    %52 = vector.broadcast %cst_25 : f32 to vector<128x1xf32>
    %53 = arith.divf %51, %52 : vector<128x1xf32>
    %54 = vector.broadcast %53 : vector<128x1xf32> to vector<128x128xf32>
    %55 = arith.subf %49, %54 : vector<128x128xf32>
    %56 = arith.mulf %55, %55 : vector<128x128xf32>
    %cst_26 = arith.constant dense<0.000000e+00> : vector<128xf32>
    %57 = vector.multi_reduction <add>, %56, %cst_26 [1] : vector<128x128xf32> to vector<128xf32>
    %58 = vector.shape_cast %57 : vector<128xf32> to vector<128x1xf32>
    %cst_27 = arith.constant 1.280000e+02 : f32
    %59 = vector.broadcast %cst_27 : f32 to vector<128x1xf32>
    %60 = arith.divf %58, %59 : vector<128x1xf32>
    %61 = vector.broadcast %53 : vector<128x1xf32> to vector<128x128xf32>
    %62 = arith.subf %49, %61 : vector<128x128xf32>
    %cst_28 = arith.constant 9.99999974E-6 : f32
    %63 = vector.broadcast %cst_28 : f32 to vector<128x1xf32>
    %64 = arith.addf %60, %63 : vector<128x1xf32>
    %65 = math.rsqrt %64 : vector<128x1xf32>
    %66 = vector.broadcast %65 : vector<128x1xf32> to vector<128x128xf32>
    %67 = arith.mulf %62, %66 : vector<128x128xf32>
    %68 = vector.extract_strided_slice %46 {offsets = [1, 0], sizes = [1, 128], strides = [1, 1]} : vector<3x128xf32> to vector<1x128xf32>
    %69 = vector.broadcast %68 : vector<1x128xf32> to vector<128x128xf32>
    %70 = arith.mulf %67, %69 : vector<128x128xf32>
    %71 = vector.extract_strided_slice %46 {offsets = [2, 0], sizes = [1, 128], strides = [1, 1]} : vector<3x128xf32> to vector<1x128xf32>
    %72 = vector.broadcast %71 : vector<1x128xf32> to vector<128x128xf32>
    %73 = arith.addf %70, %72 : vector<128x128xf32>
    %cst_29 = arith.constant 0.000000e+00 : f32
    %74 = vector.broadcast %cst_29 : f32 to vector<128x128xf32>
    %75 = arith.maximumf %73, %74 : vector<128x128xf32>
    %c1_30 = arith.constant 1 : index
    %c0_31 = arith.constant 0 : index
    %c0_32 = arith.constant 0 : index
    %76 = vector.load %arg4[%c1_30, %c0_31, %c0_32] : memref<3x128x128xbf16, #tpu.memory_space<vmem>>, vector<1x128x128xbf16>
    %77 = vector.shape_cast %76 : vector<1x128x128xbf16> to vector<128x128xbf16>
    %78 = arith.truncf %75 : vector<128x128xf32> to vector<128x128xbf16>
    %cst_33 = arith.constant dense<0.000000e+00> : vector<128x128xf32>
    %79 = tpu.matmul %78, %77, %cst_33 {dimension_numbers = #tpu.dot_dimension_numbers<[1], [0], [0], [1], [0, 0, 1, 1], [], []>} : vector<128x128xbf16>, vector<128x128xbf16>, vector<128x128xf32> -> vector<128x128xf32>
    %80 = arith.truncf %79 : vector<128x128xf32> to vector<128x128xbf16>
    %cst_34 = arith.constant dense<0.000000e+00> : vector<128x128xf32>
    %81 = tpu.matmul %1, %80, %cst_34 {dimension_numbers = #tpu.dot_dimension_numbers<[1], [0], [0], [1], [0, 0, 1, 1], [], []>} : vector<128x128xbf16>, vector<128x128xbf16>, vector<128x128xf32> -> vector<128x128xf32>
    %c2 = arith.constant 2 : index
    %c0_35 = arith.constant 0 : index
    %c0_36 = arith.constant 0 : index
    %82 = vector.load %arg5[%c2, %c0_35, %c0_36] : memref<4x3x128xf32, #tpu.memory_space<vmem>>, vector<1x3x128xf32>
    %83 = vector.shape_cast %82 : vector<1x3x128xf32> to vector<3x128xf32>
    %84 = vector.extract_strided_slice %83 {offsets = [0, 0], sizes = [1, 128], strides = [1, 1]} : vector<3x128xf32> to vector<1x128xf32>
    %85 = vector.broadcast %84 : vector<1x128xf32> to vector<128x128xf32>
    %86 = arith.addf %81, %85 : vector<128x128xf32>
    %cst_37 = arith.constant dense<0.000000e+00> : vector<128xf32>
    %87 = vector.multi_reduction <add>, %86, %cst_37 [1] : vector<128x128xf32> to vector<128xf32>
    %88 = vector.shape_cast %87 : vector<128xf32> to vector<128x1xf32>
    %cst_38 = arith.constant 1.280000e+02 : f32
    %89 = vector.broadcast %cst_38 : f32 to vector<128x1xf32>
    %90 = arith.divf %88, %89 : vector<128x1xf32>
    %91 = vector.broadcast %90 : vector<128x1xf32> to vector<128x128xf32>
    %92 = arith.subf %86, %91 : vector<128x128xf32>
    %93 = arith.mulf %92, %92 : vector<128x128xf32>
    %cst_39 = arith.constant dense<0.000000e+00> : vector<128xf32>
    %94 = vector.multi_reduction <add>, %93, %cst_39 [1] : vector<128x128xf32> to vector<128xf32>
    %95 = vector.shape_cast %94 : vector<128xf32> to vector<128x1xf32>
    %cst_40 = arith.constant 1.280000e+02 : f32
    %96 = vector.broadcast %cst_40 : f32 to vector<128x1xf32>
    %97 = arith.divf %95, %96 : vector<128x1xf32>
    %98 = vector.broadcast %90 : vector<128x1xf32> to vector<128x128xf32>
    %99 = arith.subf %86, %98 : vector<128x128xf32>
    %cst_41 = arith.constant 9.99999974E-6 : f32
    %100 = vector.broadcast %cst_41 : f32 to vector<128x1xf32>
    %101 = arith.addf %97, %100 : vector<128x1xf32>
    %102 = math.rsqrt %101 : vector<128x1xf32>
    %103 = vector.broadcast %102 : vector<128x1xf32> to vector<128x128xf32>
    %104 = arith.mulf %99, %103 : vector<128x128xf32>
    %105 = vector.extract_strided_slice %83 {offsets = [1, 0], sizes = [1, 128], strides = [1, 1]} : vector<3x128xf32> to vector<1x128xf32>
    %106 = vector.broadcast %105 : vector<1x128xf32> to vector<128x128xf32>
    %107 = arith.mulf %104, %106 : vector<128x128xf32>
    %108 = vector.extract_strided_slice %83 {offsets = [2, 0], sizes = [1, 128], strides = [1, 1]} : vector<3x128xf32> to vector<1x128xf32>
    %109 = vector.broadcast %108 : vector<1x128xf32> to vector<128x128xf32>
    %110 = arith.addf %107, %109 : vector<128x128xf32>
    %cst_42 = arith.constant 0.000000e+00 : f32
    %111 = vector.broadcast %cst_42 : f32 to vector<128x128xf32>
    %112 = arith.maximumf %110, %111 : vector<128x128xf32>
    %c2_43 = arith.constant 2 : index
    %c0_44 = arith.constant 0 : index
    %c0_45 = arith.constant 0 : index
    %113 = vector.load %arg4[%c2_43, %c0_44, %c0_45] : memref<3x128x128xbf16, #tpu.memory_space<vmem>>, vector<1x128x128xbf16>
    %114 = vector.shape_cast %113 : vector<1x128x128xbf16> to vector<128x128xbf16>
    %115 = arith.truncf %112 : vector<128x128xf32> to vector<128x128xbf16>
    %cst_46 = arith.constant dense<0.000000e+00> : vector<128x128xf32>
    %116 = tpu.matmul %115, %114, %cst_46 {dimension_numbers = #tpu.dot_dimension_numbers<[1], [0], [0], [1], [0, 0, 1, 1], [], []>} : vector<128x128xbf16>, vector<128x128xbf16>, vector<128x128xf32> -> vector<128x128xf32>
    %117 = arith.truncf %116 : vector<128x128xf32> to vector<128x128xbf16>
    %cst_47 = arith.constant dense<0.000000e+00> : vector<128x128xf32>
    %118 = tpu.matmul %1, %117, %cst_47 {dimension_numbers = #tpu.dot_dimension_numbers<[1], [0], [0], [1], [0, 0, 1, 1], [], []>} : vector<128x128xbf16>, vector<128x128xbf16>, vector<128x128xf32> -> vector<128x128xf32>
    %c3 = arith.constant 3 : index
    %c0_48 = arith.constant 0 : index
    %c0_49 = arith.constant 0 : index
    %119 = vector.load %arg5[%c3, %c0_48, %c0_49] : memref<4x3x128xf32, #tpu.memory_space<vmem>>, vector<1x3x128xf32>
    %120 = vector.shape_cast %119 : vector<1x3x128xf32> to vector<3x128xf32>
    %121 = vector.extract_strided_slice %120 {offsets = [0, 0], sizes = [1, 128], strides = [1, 1]} : vector<3x128xf32> to vector<1x128xf32>
    %122 = vector.broadcast %121 : vector<1x128xf32> to vector<128x128xf32>
    %123 = arith.addf %118, %122 : vector<128x128xf32>
    %cst_50 = arith.constant dense<0.000000e+00> : vector<128xf32>
    %124 = vector.multi_reduction <add>, %123, %cst_50 [1] : vector<128x128xf32> to vector<128xf32>
    %125 = vector.shape_cast %124 : vector<128xf32> to vector<128x1xf32>
    %cst_51 = arith.constant 1.280000e+02 : f32
    %126 = vector.broadcast %cst_51 : f32 to vector<128x1xf32>
    %127 = arith.divf %125, %126 : vector<128x1xf32>
    %128 = vector.broadcast %127 : vector<128x1xf32> to vector<128x128xf32>
    %129 = arith.subf %123, %128 : vector<128x128xf32>
    %130 = arith.mulf %129, %129 : vector<128x128xf32>
    %cst_52 = arith.constant dense<0.000000e+00> : vector<128xf32>
    %131 = vector.multi_reduction <add>, %130, %cst_52 [1] : vector<128x128xf32> to vector<128xf32>
    %132 = vector.shape_cast %131 : vector<128xf32> to vector<128x1xf32>
    %cst_53 = arith.constant 1.280000e+02 : f32
    %133 = vector.broadcast %cst_53 : f32 to vector<128x1xf32>
    %134 = arith.divf %132, %133 : vector<128x1xf32>
    %135 = vector.broadcast %127 : vector<128x1xf32> to vector<128x128xf32>
    %136 = arith.subf %123, %135 : vector<128x128xf32>
    %cst_54 = arith.constant 9.99999974E-6 : f32
    %137 = vector.broadcast %cst_54 : f32 to vector<128x1xf32>
    %138 = arith.addf %134, %137 : vector<128x1xf32>
    %139 = math.rsqrt %138 : vector<128x1xf32>
    %140 = vector.broadcast %139 : vector<128x1xf32> to vector<128x128xf32>
    %141 = arith.mulf %136, %140 : vector<128x128xf32>
    %142 = vector.extract_strided_slice %120 {offsets = [1, 0], sizes = [1, 128], strides = [1, 1]} : vector<3x128xf32> to vector<1x128xf32>
    %143 = vector.broadcast %142 : vector<1x128xf32> to vector<128x128xf32>
    %144 = arith.mulf %141, %143 : vector<128x128xf32>
    %145 = vector.extract_strided_slice %120 {offsets = [2, 0], sizes = [1, 128], strides = [1, 1]} : vector<3x128xf32> to vector<1x128xf32>
    %146 = vector.broadcast %145 : vector<1x128xf32> to vector<128x128xf32>
    %147 = arith.addf %144, %146 : vector<128x128xf32>
    %cst_55 = arith.constant 0.000000e+00 : f32
    %148 = vector.broadcast %cst_55 : f32 to vector<128x128xf32>
    %149 = arith.maximumf %147, %148 : vector<128x128xf32>
    %c0_56 = arith.constant 0 : index
    %c0_57 = arith.constant 0 : index
    %150 = memref.load %arg6[%c0_56, %c0_57] : memref<1x1xf32, #tpu.memory_space<smem>>
    %cst_58 = arith.constant 7.812500e-03 : f32
    %151 = arith.mulf %150, %cst_58 : f32
    %cst_59 = arith.constant dense<0.000000e+00> : vector<128xf32>
    %152 = vector.multi_reduction <add>, %149, %cst_59 [0] : vector<128x128xf32> to vector<128xf32>
    %153 = vector.shape_cast %152 : vector<128xf32> to vector<1x128xf32>
    %154 = vector.broadcast %151 : f32 to vector<1x128xf32>
    %155 = arith.mulf %153, %154 : vector<1x128xf32>
    %c0_60 = arith.constant 0 : index
    %c0_61 = arith.constant 0 : index
    %c0_62 = arith.constant 0 : index
    %156 = vector.load %arg7[%c0_60, %c0_61, %c0_62] : memref<1x1x128xf32, #tpu.memory_space<vmem>>, vector<1x1x128xf32>
    %157 = vector.shape_cast %156 : vector<1x1x128xf32> to vector<1x128xf32>
    %158 = vector.shape_cast %155 : vector<1x128xf32> to vector<1x1x128xf32>
    tpu.vector_store %arg7[%c0_60, %c0_61, %c0_62], %158 {strides = array<i32>} : memref<1x1x128xf32, #tpu.memory_space<vmem>>, vector<1x1x128xf32>,
    return
  }
  func.func @transform_0(%arg0: i32) -> (i32, i32, i32) {
    %c0_i32 = arith.constant 0 : i32
    %c0_i32_0 = arith.constant 0 : i32
    %c0_i32_1 = arith.constant 0 : i32
    return %arg0, %c0_i32, %c0_i32_0 : i32, i32, i32
  }
  func.func @transform_1(%arg0: i32) -> (i32, i32, i32) {
    %c0_i32 = arith.constant 0 : i32
    %c0_i32_0 = arith.constant 0 : i32
    %c0_i32_1 = arith.constant 0 : i32
    return %arg0, %c0_i32, %c0_i32_0 : i32, i32, i32
  }
  func.func @transform_2(%arg0: i32) -> (i32, i32) {
    %c0_i32 = arith.constant 0 : i32
    %c0_i32_0 = arith.constant 0 : i32
    %c0_i32_1 = arith.constant 0 : i32
    return %c0_i32, %c0_i32_0 : i32, i32
  }
  func.func @transform_3(%arg0: i32) -> (i32, i32, i32) {
    %c0_i32 = arith.constant 0 : i32
    %c0_i32_0 = arith.constant 0 : i32
    %c0_i32_1 = arith.constant 0 : i32
    %c0_i32_2 = arith.constant 0 : i32
    return %c0_i32, %c0_i32_0, %c0_i32_1 : i32, i32, i32
  }
  func.func @transform_4(%arg0: i32) -> (i32, i32, i32) {
    %c0_i32 = arith.constant 0 : i32
    %c0_i32_0 = arith.constant 0 : i32
    %c0_i32_1 = arith.constant 0 : i32
    %c0_i32_2 = arith.constant 0 : i32
    return %c0_i32, %c0_i32_0, %c0_i32_1 : i32, i32, i32
  }
  func.func @transform_5(%arg0: i32) -> (i32, i32) {
    %c0_i32 = arith.constant 0 : i32
    %c0_i32_0 = arith.constant 0 : i32
    %c0_i32_1 = arith.constant 0 : i32
    return %c0_i32, %c0_i32_0 : i32, i32
  }
  func.func @transform_6(%arg0: i32) -> (i32, i32, i32) {
    %c0_i32 = arith.constant 0 : i32
    %c0_i32_0 = arith.constant 0 : i32
    %c0_i32_1 = arith.constant 0 : i32
    return %arg0, %c0_i32, %c0_i32_0 : i32, i32, i32
  }
}

</mosaic_0001>

<llo_original>
// kernel: tpu_custom_call.1
$region0: #{tpu_custom_call.1}
  #allocation0 [shape = 'u32[]', space=smem, size = 0x4, offset = 0x4, fixed_abs, tag = 'smem constant byte address 0x4 - core index']
  #allocation1 [shape = 'u32[144,128]{1,0:T(1,128)}', space=vmem, size = 0x12000, scoped, tag = 'internal scratch']
  #allocation2 [shape = 'f32[1,1]{1,0:T(1,128)S(6)}', space=smem, size = 0x200, scoped, tag = 'scoped memory for tpu_custom_call.1']
  %s0 = inlined_call_operand.vmem [shape: bf16[4,128,128], index: 0, kind: input, shape index: {}]
  %s1 = inlined_call_operand.vmem [shape: bf16[4,128,32], index: 1, kind: input, shape index: {}]
  %s2 = inlined_call_operand.vmem [shape: bf16[32,128], index: 2, kind: input, shape index: {}]
  %s3 = inlined_call_operand.hbm [shape: bf16[3,128,128], index: 3, kind: input, shape index: {}]
  %s4 = inlined_call_operand.vmem [shape: f32[4,3,128], index: 4, kind: input, shape index: {}]
  %s5 = inlined_call_operand.<no memory space> [shape: f32[1,1], index: 5, kind: input, shape index: {}]
  %s6 = inlined_call_operand.hbm [shape: f32[4,1,128], index: 6, kind: output, shape index: {}]
  %s7 = sld [smem:[#allocation0]]
  $region61: #{tpu_custom_call.1} parent=0
    _
  %s9 = ssub.s32 1, %s7
  %s10 = scalar_select 0, %s9, %s7
  %11 = sst [smem:[#allocation2]] %s5
  $region1: #{tpu_custom_call.1} parent=0
    #allocation3 [shape = 'u8[98304]{0}', space=vmem, size = 0x18000, scoped, tag = 'input window, operand 3, single buffered']
    #allocation4 [shape = 's32[2]{0}', space=sflag, size = 0x8, scoped, tag = 'scoped memory for tpu_custom_call.1']
    #allocation5 [shape = 's32[2]{0}', space=sflag, size = 0x8, scoped, tag = 'scoped memory for tpu_custom_call.1']
    #allocation6 [shape = 'u8[1024]{0}', space=vmem, size = 0x400, scoped, tag = 'output window, operand 0']
    %12 = vsyncpa [#allocation4], 0
    %13 = vsyncpa [#allocation5], 0
    %s14 = scalar_lea.sflag [#allocation5], 1
    %15 = vsyncpa %s14, 0
    loop: start=0, step=1, limit=6
    $region2: #{tpu_custom_call.1} parent=1 // loop_pre_header
      _
    $region3: #{tpu_custom_call.1} parent=1 // loop_header
      %s17 = sphi 0, %s21
      %p18 = scmp.ge.s32.totalorder %s17, 6
      %s27 = sphi 0, %s29
      %s30 = sphi 0, %s27
      %s31 = sphi 0, %s30
      %s47 = sphi 0, %s31
      %s53 = sphi 0, %s55
      %s56 = sphi 0, %s53
      %s57 = sphi 0, %s56
      %s73 = sphi 0, %s57
      %s77 = sphi 0, %s77
      %s79 = sphi 0, %s77
      %s80 = sphi 0, %s79
      %s94 = sphi 0, %s80
      %s98 = sphi 0, %s98
      %s100 = sphi 0, %s98
      %s101 = sphi 0, %s100
      %s115 = sphi 0, %s101
      %s119 = sphi 0, %s119
      %s121 = sphi 0, %s119
      %s122 = sphi 0, %s121
      %s136 = sphi 0, %s122
      %s140 = sphi 0, %s140
      %s142 = sphi 0, %s140
      %s143 = sphi 0, %s142
      %s157 = sphi 0, %s143
      %s163 = sphi 0, %s165
      %s166 = sphi 0, %s163
      %s167 = sphi 0, %s166
      %s183 = sphi 0, %s167
    $region4: #{tpu_custom_call.1} parent=1 // loop_header_branch
      %20 = sbr.rel (%p18) target = $region8
    $region5: #{tpu_custom_call.1} parent=1 // loop_body
      %s22 = ssub.s32 %s17, 1
      %s23 = ssub.s32 %s17, 2
      %s24 = sadd.s32 %s17, 1
      %s25 = ssub.s32 %s17, %s24
      %p26 = scmp.eq.s32.totalorder %s25, 0
      %s28 = sadd.s32 %s27, 1
      %s29 = scalar_select %p26, %s27, %s28
      %p32 = pneg %p26
      %p33 = scmp.eq.s32.totalorder %s17, 3
      %p34 = por %p32, %p33
      %p35 = scmp.ne.s32.totalorder %s27, %s30
      %p36 = scmp.eq.s32.totalorder %s17, 0
      %p37 = por %p35, %p36
      %p38 = scmp.ne.s32.totalorder %s27, %s30
      %p39 = scmp.eq.s32.totalorder %s22, 3
      %p40 = por %p38, %p39
      %p41 = scmp.ne.s32.totalorder %s30, %s31
      %p42 = scmp.eq.s32.totalorder %s22, 0
      %p43 = por %p41, %p42
      %p44 = scmp.ne.s32.totalorder %s30, %s31
      %p45 = scmp.eq.s32.totalorder %s23, 3
      %p46 = por %p44, %p45
      %p48 = scmp.ne.s32.totalorder %s31, %s47
      %p49 = scmp.eq.s32.totalorder %s23, 0
      %p50 = por %p48, %p49
      %s51 = ssub.s32 %s17, %s24
      %p52 = scmp.eq.s32.totalorder %s51, 0
      %s54 = sadd.s32 %s53, 1
      %s55 = scalar_select %p52, %s53, %s54
      %p58 = pneg %p52
      %p59 = scmp.eq.s32.totalorder %s17, 3
      %p60 = por %p58, %p59
      %p61 = scmp.ne.s32.totalorder %s53, %s56
      %p62 = scmp.eq.s32.totalorder %s17, 0
      %p63 = por %p61, %p62
      %p64 = scmp.ne.s32.totalorder %s53, %s56
      %p65 = scmp.eq.s32.totalorder %s22, 3
      %p66 = por %p64, %p65
      %p67 = scmp.ne.s32.totalorder %s56, %s57
      %p68 = scmp.eq.s32.totalorder %s22, 0
      %p69 = por %p67, %p68
      %p70 = scmp.ne.s32.totalorder %s56, %s57
      %p71 = scmp.eq.s32.totalorder %s23, 3
      %p72 = por %p70, %p71
      %p74 = scmp.ne.s32.totalorder %s57, %s73
      %p75 = scmp.eq.s32.totalorder %s23, 0
      %p76 = por %p74, %p75
      %s78 = sadd.s32 %s77, 1
      %p81 = scmp.eq.s32.totalorder %s17, 3
      %p82 = scmp.ne.s32.totalorder %s77, %s79
      %p83 = scmp.eq.s32.totalorder %s17, 0
      %p84 = por %p82, %p83
      %p85 = scmp.ne.s32.totalorder %s77, %s79
      %p86 = scmp.eq.s32.totalorder %s22, 3
      %p87 = por %p85, %p86
      %p88 = scmp.ne.s32.totalorder %s79, %s80
      %p89 = scmp.eq.s32.totalorder %s22, 0
      %p90 = por %p88, %p89
      %p91 = scmp.ne.s32.totalorder %s79, %s80
      %p92 = scmp.eq.s32.totalorder %s23, 3
      %p93 = por %p91, %p92
      %p95 = scmp.ne.s32.totalorder %s80, %s94
      %p96 = scmp.eq.s32.totalorder %s23, 0
      %p97 = por %p95, %p96
      %s99 = sadd.s32 %s98, 1
      %p102 = scmp.eq.s32.totalorder %s17, 3
      %p103 = scmp.ne.s32.totalorder %s98, %s100
      %p104 = scmp.eq.s32.totalorder %s17, 0
      %p105 = por %p103, %p104
      %p106 = scmp.ne.s32.totalorder %s98, %s100
      %p107 = scmp.eq.s32.totalorder %s22, 3
      %p108 = por %p106, %p107
      %p109 = scmp.ne.s32.totalorder %s100, %s101
      %p110 = scmp.eq.s32.totalorder %s22, 0
      %p111 = por %p109, %p110
      %p112 = scmp.ne.s32.totalorder %s100, %s101
      %p113 = scmp.eq.s32.totalorder %s23, 3
      %p114 = por %p112, %p113
      %p116 = scmp.ne.s32.totalorder %s101, %s115
      %p117 = scmp.eq.s32.totalorder %s23, 0
      %p118 = por %p116, %p117
      %s120 = sadd.s32 %s119, 1
      %p123 = scmp.eq.s32.totalorder %s17, 3
      %p124 = scmp.ne.s32.totalorder %s119, %s121
      %p125 = scmp.eq.s32.totalorder %s17, 0
      %p126 = por %p124, %p125
      %p127 = scmp.ne.s32.totalorder %s119, %s121
      %p128 = scmp.eq.s32.totalorder %s22, 3
      %p129 = por %p127, %p128
      %p130 = scmp.ne.s32.totalorder %s121, %s122
      %p131 = scmp.eq.s32.totalorder %s22, 0
      %p132 = por %p130, %p131
      %p133 = scmp.ne.s32.totalorder %s121, %s122
      %p134 = scmp.eq.s32.totalorder %s23, 3
      %p135 = por %p133, %p134
      %p137 = scmp.ne.s32.totalorder %s122, %s136
      %p138 = scmp.eq.s32.totalorder %s23, 0
      %p139 = por %p137, %p138
      %s141 = sadd.s32 %s140, 1
      %p144 = scmp.eq.s32.totalorder %s17, 3
      %p145 = scmp.ne.s32.totalorder %s140, %s142
      %p146 = scmp.eq.s32.totalorder %s17, 0
      %p147 = por %p145, %p146
      %p148 = scmp.ne.s32.totalorder %s140, %s142
      %p149 = scmp.eq.s32.totalorder %s22, 3
      %p150 = por %p148, %p149
      %p151 = scmp.ne.s32.totalorder %s142, %s143
      %p152 = scmp.eq.s32.totalorder %s22, 0
      %p153 = por %p151, %p152
      %p154 = scmp.ne.s32.totalorder %s142, %s143
      %p155 = scmp.eq.s32.totalorder %s23, 3
      %p156 = por %p154, %p155
      %p158 = scmp.ne.s32.totalorder %s143, %s157
      %p159 = scmp.eq.s32.totalorder %s23, 0
      %p160 = por %p158, %p159
      %s161 = ssub.s32 %s17, %s24
      %p162 = scmp.eq.s32.totalorder %s161, 0
      %s164 = sadd.s32 %s163, 1
      %s165 = scalar_select %p162, %s163, %s164
      %p168 = pneg %p162
      %p169 = scmp.eq.s32.totalorder %s17, 3
      %p170 = por %p168, %p169
      %p171 = scmp.ne.s32.totalorder %s163, %s166
      %p172 = scmp.eq.s32.totalorder %s17, 0
      %p173 = por %p171, %p172
      %p174 = scmp.ne.s32.totalorder %s163, %s166
      %p175 = scmp.eq.s32.totalorder %s22, 3
      %p176 = por %p174, %p175
      %p177 = scmp.ne.s32.totalorder %s166, %s167
      %p178 = scmp.eq.s32.totalorder %s22, 0
      %p179 = por %p177, %p178
      %p180 = scmp.ne.s32.totalorder %s166, %s167
      %p181 = scmp.eq.s32.totalorder %s23, 3
      %p182 = por %p180, %p181
      %p184 = scmp.ne.s32.totalorder %s167, %s183
      %p185 = scmp.eq.s32.totalorder %s23, 0
      %p186 = por %p184, %p185
      %p187 = scmp.le.s32.totalorder 1, %s17
      %p188 = scmp.lt.s32.totalorder %s17, 5
      %p189 = pnand %p187, %p188
      %p190 = pneg %p189
      // Predicated region
      $region9: #{tpu_custom_call.1} parent=5 // pred_check
        _
      $region10: #{tpu_custom_call.1} parent=5 // pred_check_branch
        %192 = sbr.rel (%p189) target = $region12
      $region11: #{tpu_custom_call.1} parent=5 // pred_region
        %s193 = ssub.s32 %s17, 1
        // Predicated region
        $region13: #{tpu_custom_call.1} parent=11 // pred_check
          %p194 = pneg %p90
        $region14: #{tpu_custom_call.1} parent=11 // pred_check_branch
          %196 = sbr.rel (%p194) target = $region16
        $region15: #{tpu_custom_call.1} parent=11 // pred_region
          _
        $region16: #{tpu_custom_call.1} parent=11 // pred_fallthru
          _
        // Predicated region
        $region17: #{tpu_custom_call.1} parent=11 // pred_check
          %p197 = pneg %p111
        $region18: #{tpu_custom_call.1} parent=11 // pred_check_branch
          %199 = sbr.rel (%p197) target = $region20
        $region19: #{tpu_custom_call.1} parent=11 // pred_region
          %s201 = ssub.s32 3072, 3072
          %202 = vsyncadd [#allocation4], %s201
          %s203 = sshll.u32 [#allocation3], 4
          %s204 = int_to_ptr.vmem [resolvable:$true] %s203
          %209 = dma.hbm_to_vmem [thread:$0]  %s3, 3072, %s204, [#allocation4], 64, 64, 4
        $region20: #{tpu_custom_call.1} parent=11 // pred_fallthru
          _
        // Predicated region
        $region21: #{tpu_custom_call.1} parent=11 // pred_check
          %p210 = pneg %p132
        $region22: #{tpu_custom_call.1} parent=11 // pred_check_branch
          %212 = sbr.rel (%p210) target = $region24
        $region23: #{tpu_custom_call.1} parent=11 // pred_region
          _
        $region24: #{tpu_custom_call.1} parent=11 // pred_fallthru
          _
        // Predicated region
        $region25: #{tpu_custom_call.1} parent=11 // pred_check
          %p213 = pneg %p153
        $region26: #{tpu_custom_call.1} parent=11 // pred_check_branch
          %215 = sbr.rel (%p213) target = $region28
        $region27: #{tpu_custom_call.1} parent=11 // pred_region
          _
        $region28: #{tpu_custom_call.1} parent=11 // pred_fallthru
          _
      $region12: #{tpu_custom_call.1} parent=5 // pred_fallthru
        _
      %p216 = scmp.lt.s32.totalorder %s17, 4
      // Predicated region
      $region29: #{tpu_custom_call.1} parent=5 // pred_check
        %p217 = pneg %p216
      $region30: #{tpu_custom_call.1} parent=5 // pred_check_branch
        %219 = sbr.rel (%p217) target = $region32
      $region31: #{tpu_custom_call.1} parent=5 // pred_region
        // Predicated region
        $region33: #{tpu_custom_call.1} parent=31 // pred_check
          %p220 = pneg %p37
        $region34: #{tpu_custom_call.1} parent=31 // pred_check_branch
          %222 = sbr.rel (%p220) target = $region36
        $region35: #{tpu_custom_call.1} parent=31 // pred_region
          %p223 = scmp.lt.s32.totalorder %s17, 3
          %s224 = scalar_select %p223, %s17, 3
          %s225 = smul.addr %s224, 16
          %s226 = smul.addr %s225, 4
          %s227 = scalar_lea.vmem %s0, %s226
        $region36: #{tpu_custom_call.1} parent=31 // pred_fallthru
          _
        // Predicated region
        $region37: #{tpu_custom_call.1} parent=31 // pred_check
          %p228 = pneg %p63
        $region38: #{tpu_custom_call.1} parent=31 // pred_check_branch
          %230 = sbr.rel (%p228) target = $region40
        $region39: #{tpu_custom_call.1} parent=31 // pred_region
          %p231 = scmp.lt.s32.totalorder %s17, 3
          %s232 = scalar_select %p231, %s17, 3
          %s233 = smul.addr %s232, 16
          %s234 = smul.addr %s233, 4
          %s235 = scalar_lea.vmem %s1, %s234
        $region40: #{tpu_custom_call.1} parent=31 // pred_fallthru
          _
      $region32: #{tpu_custom_call.1} parent=5 // pred_fallthru
        _
      %p236 = scmp.le.s32.totalorder 1, %s17
      %p237 = scmp.lt.s32.totalorder %s17, 5
      %p238 = pnand %p236, %p237
      %p239 = pneg %p238
      // Predicated region
      $region41: #{tpu_custom_call.1} parent=5 // pred_check
        _
      $region42: #{tpu_custom_call.1} parent=5 // pred_check_branch
        %241 = sbr.rel (%p238) target = $region44
      $region43: #{tpu_custom_call.1} parent=5 // pred_region
        %s242 = ssub.s32 %s17, 1
        // Predicated region
        $region45: #{tpu_custom_call.1} parent=43 // pred_check
          %p243 = pneg %p111
        $region46: #{tpu_custom_call.1} parent=43 // pred_check_branch
          %245 = sbr.rel (%p243) target = $region48
        $region47: #{tpu_custom_call.1} parent=43 // pred_region
          %246 = dma.done [#allocation4], 3072
        $region48: #{tpu_custom_call.1} parent=43 // pred_fallthru
          _
        %p247 = scmp.lt.s32.totalorder %s22, 3
        %s248 = scalar_select %p247, %s22, 3
        %s249 = smul.addr %s248, 16
        %s250 = smul.addr %s249, 4
        %s251 = scalar_lea.vmem %s0, %s250
        %p252 = pneg %p43
        %p253 = pneg %p40
        %p254 = scmp.lt.s32.totalorder %s22, 3
        %s255 = scalar_select %p254, %s22, 3
        %s256 = smul.addr %s255, 16
        %s257 = smul.addr %s256, 4
        %s258 = scalar_lea.vmem %s1, %s257
        %p259 = pneg %p69
        %p260 = pneg %p66
        %p261 = pneg %p90
        %p262 = pneg %p87
        %p263 = pneg %p111
        %p264 = pneg %p108
        %p265 = pneg %p132
        %p266 = pneg %p129
        %p267 = pneg %p153
        %p268 = pneg %p150
        %p269 = pneg %p179
        %p270 = pneg %p176
        %s271 = sand.u32 %s166, 1
        %s272 = scalar_lea.sflag [#allocation5], %s271
        %s273 = sand.u32 %s166, 1
        %s274 = scalar_lea.vmem [#allocation6], %s273
        %p275 = scmp.lt.s32.totalorder %s22, 3
        %s276 = scalar_select %p275, %s22, 3
        %s277 = smul.addr %s276, 16
        %s278 = smul.addr %s277, 4
        %s279 = scalar_lea.vmem %s0, %s278
        %p280 = scmp.lt.s32.totalorder %s22, 3
        %s281 = scalar_select %p280, %s22, 3
        %s282 = smul.addr %s281, 16
        %s283 = smul.addr %s282, 4
        %s284 = scalar_lea.vmem %s1, %s283
        %v286 = vld [vmem:[%s279] sm:$0xf]
        %v287 = vld [vmem:[%s279 + $0x4] sm:$0xf]
        %v288 = vld [vmem:[%s279 + $0x8] sm:$0xf]
        %v289 = vld [vmem:[%s279 + $0xc] sm:$0xf]
        %v290 = vld [vmem:[%s279 + $0x10] sm:$0xf]
        %v291 = vld [vmem:[%s279 + $0x14] sm:$0xf]
        %v292 = vld [vmem:[%s279 + $0x18] sm:$0xf]
        %v293 = vld [vmem:[%s279 + $0x1c] sm:$0xf]
        %v294 = vld [vmem:[%s279 + $0x20] sm:$0xf]
        %v295 = vld [vmem:[%s279 + $0x24] sm:$0xf]
        %v296 = vld [vmem:[%s279 + $0x28] sm:$0xf]
        %v297 = vld [vmem:[%s279 + $0x2c] sm:$0xf]
        %v298 = vld [vmem:[%s279 + $0x30] sm:$0xf]
        %v299 = vld [vmem:[%s279 + $0x34] sm:$0xf]
        %v300 = vld [vmem:[%s279 + $0x38] sm:$0xf]
        %v301 = vld [vmem:[%s279 + $0x3c] sm:$0xf]
        %v302 = vld [vmem:[%s284] sm:$0xf]
        %v303 = vld [vmem:[%s284 + $0x4] sm:$0xf]
        %v304 = vld [vmem:[%s284 + $0x8] sm:$0xf]
        %v305 = vld [vmem:[%s284 + $0xc] sm:$0xf]
        %v306 = vld [vmem:[%s284 + $0x10] sm:$0xf]
        %v307 = vld [vmem:[%s284 + $0x14] sm:$0xf]
        %v308 = vld [vmem:[%s284 + $0x18] sm:$0xf]
        %v309 = vld [vmem:[%s284 + $0x1c] sm:$0xf]
        %v310 = vld [vmem:[%s284 + $0x20] sm:$0xf]
        %v311 = vld [vmem:[%s284 + $0x24] sm:$0xf]
        %v312 = vld [vmem:[%s284 + $0x28] sm:$0xf]
        %v313 = vld [vmem:[%s284 + $0x2c] sm:$0xf]
        %v314 = vld [vmem:[%s284 + $0x30] sm:$0xf]
        %v315 = vld [vmem:[%s284 + $0x34] sm:$0xf]
        %v316 = vld [vmem:[%s284 + $0x38] sm:$0xf]
        %v317 = vld [vmem:[%s284 + $0x3c] sm:$0xf]
        %v318 = vld [vmem:[%s2] sm:$0xf]
        %v319 = vld [vmem:[%s2 + $0x4] sm:$0xf]
        %v320 = vld [vmem:[%s2 + $0x8] sm:$0xf]
        %v321 = vld [vmem:[%s2 + $0xc] sm:$0xf]
        %v338 = vunpack.c.l.b16 %v286
        %v339 = vunpack.c.l.b16 %v287
        %v340 = vunpack.c.l.b16 %v288
        %v341 = vunpack.c.l.b16 %v289
        %v342 = vunpack.c.l.b16 %v290
        %v343 = vunpack.c.l.b16 %v291
        %v344 = vunpack.c.l.b16 %v292
        %v345 = vunpack.c.l.b16 %v293
        %v346 = vunpack.c.l.b16 %v294
        %v347 = vunpack.c.l.b16 %v295
        %v348 = vunpack.c.l.b16 %v296
        %v349 = vunpack.c.l.b16 %v297
        %v350 = vunpack.c.l.b16 %v298
        %v351 = vunpack.c.l.b16 %v299
        %v352 = vunpack.c.l.b16 %v300
        %v353 = vunpack.c.l.b16 %v301
        %v354 = vpack.c.b16 %v339, %v338
        %v355 = vpack.c.b16 %v341, %v340
        %v356 = vpack.c.b16 %v343, %v342
        %v357 = vpack.c.b16 %v345, %v344
        %v358 = vpack.c.b16 %v347, %v346
        %v359 = vpack.c.b16 %v349, %v348
        %v360 = vpack.c.b16 %v351, %v350
        %v361 = vpack.c.b16 %v353, %v352
        %v386 = vunpack.c.l.b16 %v302
        %v387 = vunpack.c.l.b16 %v303
        %v388 = vunpack.c.l.b16 %v304
        %v389 = vunpack.c.l.b16 %v305
        %v390 = vunpack.c.l.b16 %v306
        %v391 = vunpack.c.l.b16 %v307
        %v392 = vunpack.c.l.b16 %v308
        %v393 = vunpack.c.l.b16 %v309
        %v394 = vunpack.c.l.b16 %v310
        %v395 = vunpack.c.l.b16 %v311
        %v396 = vunpack.c.l.b16 %v312
        %v397 = vunpack.c.l.b16 %v313
        %v398 = vunpack.c.l.b16 %v314
        %v399 = vunpack.c.l.b16 %v315
        %v400 = vunpack.c.l.b16 %v316
        %v401 = vunpack.c.l.b16 %v317
        %v402 = vpack.c.b16 %v387, %v386
        %v403 = vpack.c.b16 %v389, %v388
        %v404 = vpack.c.b16 %v391, %v390
        %v405 = vpack.c.b16 %v393, %v392
        %v406 = vpack.c.b16 %v395, %v394
        %v407 = vpack.c.b16 %v397, %v396
        %v408 = vpack.c.b16 %v399, %v398
        %v409 = vpack.c.b16 %v401, %v400
        %418 = vmatprep.subr.bf16.mxu0 0
        %419 = vmatpush1.bf16.msra.mxu0 %v402
        %420 = vmatprep.subr.bf16.mxu0 0
        %421 = vmatpush1.bf16.msra.mxu0 %v403
        %422 = vmatprep.subr.bf16.mxu0 0
        %423 = vmatpush1.bf16.msra.mxu0 %v404
        %424 = vmatprep.subr.bf16.mxu0 0
        %425 = vmatpush1.bf16.msra.mxu0 %v405
        %426 = vmatprep.subr.bf16.mxu0 0
        %427 = vmatpush1.bf16.msra.mxu0 %v406
        %428 = vmatprep.subr.bf16.mxu0 0
        %429 = vmatpush1.bf16.msra.mxu0 %v407
        %430 = vmatprep.subr.bf16.mxu0 0
        %431 = vmatpush1.bf16.msra.mxu0 %v408
        %432 = vmatprep.subr.bf16.mxu0 0
        %433 = vmatpush1.bf16.msra.mxu0 %v409
        %434 = vmatprep.subr.bf16.mxu0 0
        %435 = vmatpush1.bf16.msra.mxu0 0
        %436 = vmatprep.subr.bf16.mxu0 0
        %437 = vmatpush1.bf16.msra.mxu0 0
        %438 = vmatprep.subr.bf16.mxu0 0
        %439 = vmatpush1.bf16.msra.mxu0 0
        %440 = vmatprep.subr.bf16.mxu0 0
        %441 = vmatpush1.bf16.msra.mxu0 0
        %442 = vmatprep.subr.bf16.mxu0 0
        %443 = vmatpush1.bf16.msra.mxu0 0
        %444 = vmatprep.subr.bf16.mxu0 0
        %445 = vmatpush1.bf16.msra.mxu0 0
        %446 = vmatprep.subr.bf16.mxu0 0
        %447 = vmatpush1.bf16.msra.mxu0 0
        %448 = vmatprep.subr.bf16.mxu0 0
        %449 = vmatpush1.bf16.msra.mxu0 0
        %450 = vmatprep.mubr.bf16.mxu0 0
        %451 = vmatmul.mubr.bf16.gmra.mrb[0].mxu0 %v354
        %v452 = vpop.f32.mrb[0].mxu0
        %v453 = vadd.f32 0.0, %v452
        %v454 = vpop.f32.mrb[0].mxu0
        %v455 = vpop.f32.mrb[0].mxu0
        %v456 = vadd.f32 0.0, %v455
        %v457 = vpop.f32.mrb[0].mxu0
        %458 = vmatprep.mubr.bf16.mxu0 0
        %459 = vmatmul.mubr.bf16.gmra.mrb[0].mxu0 %v355
        %v460 = vpop.f32.mrb[0].mxu0
        %v461 = vadd.f32 0.0, %v460
        %v462 = vpop.f32.mrb[0].mxu0
        %v463 = vpop.f32.mrb[0].mxu0
        %v464 = vadd.f32 0.0, %v463
        %v465 = vpop.f32.mrb[0].mxu0
        %466 = vmatprep.mubr.bf16.mxu0 0
        %467 = vmatmul.mubr.bf16.gmra.mrb[0].mxu0 %v356
        %v468 = vpop.f32.mrb[0].mxu0
        %v469 = vadd.f32 0.0, %v468
        %v470 = vpop.f32.mrb[0].mxu0
        %v471 = vpop.f32.mrb[0].mxu0
        %v472 = vadd.f32 0.0, %v471
        %v473 = vpop.f32.mrb[0].mxu0
        %474 = vmatprep.mubr.bf16.mxu0 0
        %475 = vmatmul.mubr.bf16.gmra.mrb[0].mxu0 %v357
        %v476 = vpop.f32.mrb[0].mxu0
        %v477 = vadd.f32 0.0, %v476
        %v478 = vpop.f32.mrb[0].mxu0
        %v479 = vpop.f32.mrb[0].mxu0
        %v480 = vadd.f32 0.0, %v479
        %v481 = vpop.f32.mrb[0].mxu0
        %482 = vmatprep.mubr.bf16.mxu0 0
        %483 = vmatmul.mubr.bf16.gmra.mrb[0].mxu0 %v358
        %v484 = vpop.f32.mrb[0].mxu0
        %v485 = vadd.f32 0.0, %v484
        %v486 = vpop.f32.mrb[0].mxu0
        %v487 = vpop.f32.mrb[0].mxu0
        %v488 = vadd.f32 0.0, %v487
        %v489 = vpop.f32.mrb[0].mxu0
        %490 = vmatprep.mubr.bf16.mxu0 0
        %491 = vmatmul.mubr.bf16.gmra.mrb[0].mxu0 %v359
        %v492 = vpop.f32.mrb[0].mxu0
        %v493 = vadd.f32 0.0, %v492
        %v494 = vpop.f32.mrb[0].mxu0
        %v495 = vpop.f32.mrb[0].mxu0
        %v496 = vadd.f32 0.0, %v495
        %v497 = vpop.f32.mrb[0].mxu0
        %498 = vmatprep.mubr.bf16.mxu0 0
        %499 = vmatmul.mubr.bf16.gmra.mrb[0].mxu0 %v360
        %v500 = vpop.f32.mrb[0].mxu0
        %v501 = vadd.f32 0.0, %v500
        %v502 = vpop.f32.mrb[0].mxu0
        %v503 = vpop.f32.mrb[0].mxu0
        %v504 = vadd.f32 0.0, %v503
        %v505 = vpop.f32.mrb[0].mxu0
        %506 = vmatprep.mubr.bf16.mxu0 0
        %507 = vmatmul.mubr.bf16.gmra.mrb[0].mxu0 %v361
        %v508 = vpop.f32.mrb[0].mxu0
        %v509 = vadd.f32 0.0, %v508
        %v510 = vpop.f32.mrb[0].mxu0
        %v511 = vpop.f32.mrb[0].mxu0
        %v512 = vadd.f32 0.0, %v511
        %v513 = vpop.f32.mrb[0].mxu0
        %514 = vdwg.mxu0
        %v515 = vpack.c.bf16 %v456, %v453
        %v516 = vpack.c.bf16 %v464, %v461
        %v517 = vpack.c.bf16 %v472, %v469
        %v518 = vpack.c.bf16 %v480, %v477
        %v519 = vpack.c.bf16 %v488, %v485
        %v520 = vpack.c.bf16 %v496, %v493
        %v521 = vpack.c.bf16 %v504, %v501
        %v522 = vpack.c.bf16 %v512, %v509
        %v523 = vld [vmem:[%s4] sm:$0x7]
        %v524 = vlaneseq
        %v525 = vshrl.u32 %v524, 7
        %v526 = vsub.s32 0, %v525
        %v527 = vrot.slane %v523, %v526
        %v532 = vunpack.c.l.b16 %v318
        %v533 = vunpack.c.l.b16 %v319
        %v534 = vunpack.c.l.b16 %v320
        %v535 = vunpack.c.l.b16 %v321
        %v536 = vpack.c.b16 %v533, %v532
        %v537 = vpack.c.b16 %v535, %v534
        %vm540 = vcmask 261120
        %v542 = vsel %vm540, %v515, 0
        %v545 = vsel %vm540, %v516, 0
        %v548 = vsel %vm540, %v517, 0
        %v551 = vsel %vm540, %v518, 0
        %v554 = vsel %vm540, %v519, 0
        %v557 = vsel %vm540, %v520, 0
        %v560 = vsel %vm540, %v521, 0
        %v563 = vsel %vm540, %v522, 0
        %565 = vmatprep.subr.bf16.mxu0 0
        %566 = vmatpush1.bf16.msra.mxu0 %v536
        %567 = vmatprep.subr.bf16.mxu0 0
        %568 = vmatpush1.bf16.msra.mxu0 %v537
        %569 = vmatprep.subr.bf16.mxu0 0
        %570 = vmatpush1.bf16.msra.mxu0 0
        %571 = vmatprep.subr.bf16.mxu0 0
        %572 = vmatpush1.bf16.msra.mxu0 0
        %573 = vmatprep.subr.bf16.mxu0 0
        %574 = vmatpush1.bf16.msra.mxu0 0
        %575 = vmatprep.subr.bf16.mxu0 0
        %576 = vmatpush1.bf16.msra.mxu0 0
        %577 = vmatprep.subr.bf16.mxu0 0
        %578 = vmatpush1.bf16.msra.mxu0 0
        %579 = vmatprep.subr.bf16.mxu0 0
        %580 = vmatpush1.bf16.msra.mxu0 0
        %581 = vmatprep.subr.bf16.mxu0 0
        %582 = vmatpush1.bf16.msra.mxu0 0
        %583 = vmatprep.subr.bf16.mxu0 0
        %584 = vmatpush1.bf16.msra.mxu0 0
        %585 = vmatprep.subr.bf16.mxu0 0
        %586 = vmatpush1.bf16.msra.mxu0 0
        %587 = vmatprep.subr.bf16.mxu0 0
        %588 = vmatpush1.bf16.msra.mxu0 0
        %589 = vmatprep.subr.bf16.mxu0 0
        %590 = vmatpush1.bf16.msra.mxu0 0
        %591 = vmatprep.subr.bf16.mxu0 0
        %592 = vmatpush1.bf16.msra.mxu0 0
        %593 = vmatprep.subr.bf16.mxu0 0
        %594 = vmatpush1.bf16.msra.mxu0 0
        %595 = vmatprep.subr.bf16.mxu0 0
        %596 = vmatpush1.bf16.msra.mxu0 0
        %597 = vmatprep.mubr.bf16.mxu0 0
        %598 = vmatmul.mubr.bf16.gmra.mrb[0].mxu0 %v542
        %v599 = vpop.f32.mrb[0].mxu0
        %v600 = vadd.f32 %v527, %v599
        %v601 = vpop.f32.mrb[0].mxu0
        %v602 = vpop.f32.mrb[0].mxu0
        %v603 = vadd.f32 %v527, %v602
        %v604 = vpop.f32.mrb[0].mxu0
        %605 = vmatprep.mubr.bf16.mxu0 0
        %606 = vmatmul.mubr.bf16.gmra.mrb[0].mxu0 %v545
        %v607 = vpop.f32.mrb[0].mxu0
        %v608 = vadd.f32 %v527, %v607
        %v609 = vpop.f32.mrb[0].mxu0
        %v610 = vpop.f32.mrb[0].mxu0
        %v611 = vadd.f32 %v527, %v610
        %v612 = vpop.f32.mrb[0].mxu0
        %613 = vmatprep.mubr.bf16.mxu0 0
        %614 = vmatmul.mubr.bf16.gmra.mrb[0].mxu0 %v548
        %v615 = vpop.f32.mrb[0].mxu0
        %v616 = vadd.f32 %v527, %v615
        %v617 = vpop.f32.mrb[0].mxu0
        %v618 = vpop.f32.mrb[0].mxu0
        %v619 = vadd.f32 %v527, %v618
        %v620 = vpop.f32.mrb[0].mxu0
        %621 = vmatprep.mubr.bf16.mxu0 0
        %622 = vmatmul.mubr.bf16.gmra.mrb[0].mxu0 %v551
        %v623 = vpop.f32.mrb[0].mxu0
        %v624 = vadd.f32 %v527, %v623
        %v625 = vpop.f32.mrb[0].mxu0
        %v626 = vpop.f32.mrb[0].mxu0
        %v627 = vadd.f32 %v527, %v626
        %v628 = vpop.f32.mrb[0].mxu0
        %629 = vmatprep.mubr.bf16.mxu0 0
        %630 = vmatmul.mubr.bf16.gmra.mrb[0].mxu0 %v554
        %v631 = vpop.f32.mrb[0].mxu0
        %v632 = vadd.f32 %v527, %v631
        %v633 = vpop.f32.mrb[0].mxu0
        %v634 = vpop.f32.mrb[0].mxu0
        %v635 = vadd.f32 %v527, %v634
        %v636 = vpop.f32.mrb[0].mxu0
        %637 = vmatprep.mubr.bf16.mxu0 0
        %638 = vmatmul.mubr.bf16.gmra.mrb[0].mxu0 %v557
        %v639 = vpop.f32.mrb[0].mxu0
        %v640 = vadd.f32 %v527, %v639
        %v641 = vpop.f32.mrb[0].mxu0
        %v642 = vpop.f32.mrb[0].mxu0
        %v643 = vadd.f32 %v527, %v642
        %v644 = vpop.f32.mrb[0].mxu0
        %645 = vmatprep.mubr.bf16.mxu0 0
        %646 = vmatmul.mubr.bf16.gmra.mrb[0].mxu0 %v560
        %v647 = vpop.f32.mrb[0].mxu0
        %v648 = vadd.f32 %v527, %v647
        %v649 = vpop.f32.mrb[0].mxu0
        %v650 = vpop.f32.mrb[0].mxu0
        %v651 = vadd.f32 %v527, %v650
        %v652 = vpop.f32.mrb[0].mxu0
        %653 = vmatprep.mubr.bf16.mxu0 0
        %654 = vmatmul.mubr.bf16.gmra.mrb[0].mxu0 %v563
        %v655 = vpop.f32.mrb[0].mxu0
        %v656 = vadd.f32 %v527, %v655
        %v657 = vpop.f32.mrb[0].mxu0
        %v658 = vpop.f32.mrb[0].mxu0
        %v659 = vadd.f32 %v527, %v658
        %v660 = vpop.f32.mrb[0].mxu0
        %661 = vdwg.mxu0
        %662 = vadd.xlane.f32.xlu0 %v600
        %v663 = vpop.xlane.xlu0 %662
        %664 = vadd.xlane.f32.xlu0 %v603
        %v665 = vpop.xlane.xlu0 %664
        %666 = vadd.xlane.f32.xlu0 %v608
        %v667 = vpop.xlane.xlu0 %666
        %668 = vadd.xlane.f32.xlu0 %v611
        %v669 = vpop.xlane.xlu0 %668
        %670 = vadd.xlane.f32.xlu0 %v616
        %v671 = vpop.xlane.xlu0 %670
        %672 = vadd.xlane.f32.xlu0 %v619
        %v673 = vpop.xlane.xlu0 %672
        %674 = vadd.xlane.f32.xlu0 %v624
        %v675 = vpop.xlane.xlu0 %674
        %676 = vadd.xlane.f32.xlu0 %v627
        %v677 = vpop.xlane.xlu0 %676
        %678 = vadd.xlane.f32.xlu0 %v632
        %v679 = vpop.xlane.xlu0 %678
        %680 = vadd.xlane.f32.xlu0 %v635
        %v681 = vpop.xlane.xlu0 %680
        %682 = vadd.xlane.f32.xlu0 %v640
        %v683 = vpop.xlane.xlu0 %682
        %684 = vadd.xlane.f32.xlu0 %v643
        %v685 = vpop.xlane.xlu0 %684
        %686 = vadd.xlane.f32.xlu0 %v648
        %v687 = vpop.xlane.xlu0 %686
        %688 = vadd.xlane.f32.xlu0 %v651
        %v689 = vpop.xlane.xlu0 %688
        %690 = vadd.xlane.f32.xlu0 %v656
        %v691 = vpop.xlane.xlu0 %690
        %692 = vadd.xlane.f32.xlu0 %v659
        %v693 = vpop.xlane.xlu0 %692
        %v694 = vrcp.pop 128.0
        %v695 = vmul.f32 %v663, %v694
        %v696 = vmul.f32 %v665, %v694
        %v697 = vmul.f32 %v667, %v694
        %v698 = vmul.f32 %v669, %v694
        %v699 = vmul.f32 %v671, %v694
        %v700 = vmul.f32 %v673, %v694
        %v701 = vmul.f32 %v675, %v694
        %v702 = vmul.f32 %v677, %v694
        %v703 = vmul.f32 %v679, %v694
        %v704 = vmul.f32 %v681, %v694
        %v705 = vmul.f32 %v683, %v694
        %v706 = vmul.f32 %v685, %v694
        %v707 = vmul.f32 %v687, %v694
        %v708 = vmul.f32 %v689, %v694
        %v709 = vmul.f32 %v691, %v694
        %v710 = vmul.f32 %v693, %v694
        %v711 = vsub.f32 %v600, %v695
        %v712 = vsub.f32 %v603, %v696
        %v713 = vsub.f32 %v608, %v697
        %v714 = vsub.f32 %v611, %v698
        %v715 = vsub.f32 %v616, %v699
        %v716 = vsub.f32 %v619, %v700
        %v717 = vsub.f32 %v624, %v701
        %v718 = vsub.f32 %v627, %v702
        %v719 = vsub.f32 %v632, %v703
        %v720 = vsub.f32 %v635, %v704
        %v721 = vsub.f32 %v640, %v705
        %v722 = vsub.f32 %v643, %v706
        %v723 = vsub.f32 %v648, %v707
        %v724 = vsub.f32 %v651, %v708
        %v725 = vsub.f32 %v656, %v709
        %v726 = vsub.f32 %v659, %v710
        %v727 = vmul.f32 %v711, %v711
        %v728 = vmul.f32 %v712, %v712
        %v729 = vmul.f32 %v713, %v713
        %v730 = vmul.f32 %v714, %v714
        %v731 = vmul.f32 %v715, %v715
        %v732 = vmul.f32 %v716, %v716
        %v733 = vmul.f32 %v717, %v717
        %v734 = vmul.f32 %v718, %v718
        %v735 = vmul.f32 %v719, %v719
        %v736 = vmul.f32 %v720, %v720
        %v737 = vmul.f32 %v721, %v721
        %v738 = vmul.f32 %v722, %v722
        %v739 = vmul.f32 %v723, %v723
        %v740 = vmul.f32 %v724, %v724
        %v741 = vmul.f32 %v725, %v725
        %v742 = vmul.f32 %v726, %v726
        %743 = vadd.xlane.f32.xlu0 %v727
        %v744 = vpop.xlane.xlu0 %743
        %745 = vadd.xlane.f32.xlu0 %v728
        %v746 = vpop.xlane.xlu0 %745
        %747 = vadd.xlane.f32.xlu0 %v729
        %v748 = vpop.xlane.xlu0 %747
        %749 = vadd.xlane.f32.xlu0 %v730
        %v750 = vpop.xlane.xlu0 %749
        %751 = vadd.xlane.f32.xlu0 %v731
        %v752 = vpop.xlane.xlu0 %751
        %753 = vadd.xlane.f32.xlu0 %v732
        %v754 = vpop.xlane.xlu0 %753
        %755 = vadd.xlane.f32.xlu0 %v733
        %v756 = vpop.xlane.xlu0 %755
        %757 = vadd.xlane.f32.xlu0 %v734
        %v758 = vpop.xlane.xlu0 %757
        %759 = vadd.xlane.f32.xlu0 %v735
        %v760 = vpop.xlane.xlu0 %759
        %761 = vadd.xlane.f32.xlu0 %v736
        %v762 = vpop.xlane.xlu0 %761
        %763 = vadd.xlane.f32.xlu0 %v737
        %v764 = vpop.xlane.xlu0 %763
        %765 = vadd.xlane.f32.xlu0 %v738
        %v766 = vpop.xlane.xlu0 %765
        %767 = vadd.xlane.f32.xlu0 %v739
        %v768 = vpop.xlane.xlu0 %767
        %769 = vadd.xlane.f32.xlu0 %v740
        %v770 = vpop.xlane.xlu0 %769
        %771 = vadd.xlane.f32.xlu0 %v741
        %v772 = vpop.xlane.xlu0 %771
        %773 = vadd.xlane.f32.xlu0 %v742
        %v774 = vpop.xlane.xlu0 %773
        %v775 = vmul.f32 %v744, %v694
        %v776 = vmul.f32 %v746, %v694
        %v777 = vmul.f32 %v748, %v694
        %v778 = vmul.f32 %v750, %v694
        %v779 = vmul.f32 %v752, %v694
        %v780 = vmul.f32 %v754, %v694
        %v781 = vmul.f32 %v756, %v694
        %v782 = vmul.f32 %v758, %v694
        %v783 = vmul.f32 %v760, %v694
        %v784 = vmul.f32 %v762, %v694
        %v785 = vmul.f32 %v764, %v694
        %v786 = vmul.f32 %v766, %v694
        %v787 = vmul.f32 %v768, %v694
        %v788 = vmul.f32 %v770, %v694
        %v789 = vmul.f32 %v772, %v694
        %v790 = vmul.f32 %v774, %v694
        %v791 = vadd.f32 %v775, 1e-05
        %v792 = vadd.f32 %v776, 1e-05
        %v793 = vadd.f32 %v777, 1e-05
        %v794 = vadd.f32 %v778, 1e-05
        %v795 = vadd.f32 %v779, 1e-05
        %v796 = vadd.f32 %v780, 1e-05
        %v797 = vadd.f32 %v781, 1e-05
        %v798 = vadd.f32 %v782, 1e-05
        %v799 = vadd.f32 %v783, 1e-05
        %v800 = vadd.f32 %v784, 1e-05
        %v801 = vadd.f32 %v785, 1e-05
        %v802 = vadd.f32 %v786, 1e-05
        %v803 = vadd.f32 %v787, 1e-05
        %v804 = vadd.f32 %v788, 1e-05
        %v805 = vadd.f32 %v789, 1e-05
        %v806 = vadd.f32 %v790, 1e-05
        %v807 = vrsqrt.pop %v791
        %v808 = vrsqrt.pop %v792
        %v809 = vrsqrt.pop %v793
        %v810 = vrsqrt.pop %v794
        %v811 = vrsqrt.pop %v795
        %v812 = vrsqrt.pop %v796
        %v813 = vrsqrt.pop %v797
        %v814 = vrsqrt.pop %v798
        %v815 = vrsqrt.pop %v799
        %v816 = vrsqrt.pop %v800
        %v817 = vrsqrt.pop %v801
        %v818 = vrsqrt.pop %v802
        %v819 = vrsqrt.pop %v803
        %v820 = vrsqrt.pop %v804
        %v821 = vrsqrt.pop %v805
        %v822 = vrsqrt.pop %v806
        %v823 = vmul.f32 %v711, %v807
        %v824 = vmul.f32 %v712, %v808
        %v825 = vmul.f32 %v713, %v809
        %v826 = vmul.f32 %v714, %v810
        %v827 = vmul.f32 %v715, %v811
        %v828 = vmul.f32 %v716, %v812
        %v829 = vmul.f32 %v717, %v813
        %v830 = vmul.f32 %v718, %v814
        %v831 = vmul.f32 %v719, %v815
        %v832 = vmul.f32 %v720, %v816
        %v833 = vmul.f32 %v721, %v817
        %v834 = vmul.f32 %v722, %v818
        %v835 = vmul.f32 %v723, %v819
        %v836 = vmul.f32 %v724, %v820
        %v837 = vmul.f32 %v725, %v821
        %v838 = vmul.f32 %v726, %v822
        %v839 = vlaneseq
        %v840 = vshrl.u32 %v839, 7
        %v841 = vsub.s32 1, %v840
        %v842 = vrot.slane %v523, %v841
        %v843 = vmul.f32 %v823, %v842
        %v844 = vmul.f32 %v824, %v842
        %v845 = vmul.f32 %v825, %v842
        %v846 = vmul.f32 %v826, %v842
        %v847 = vmul.f32 %v827, %v842
        %v848 = vmul.f32 %v828, %v842
        %v849 = vmul.f32 %v829, %v842
        %v850 = vmul.f32 %v830, %v842
        %v851 = vmul.f32 %v831, %v842
        %v852 = vmul.f32 %v832, %v842
        %v853 = vmul.f32 %v833, %v842
        %v854 = vmul.f32 %v834, %v842
        %v855 = vmul.f32 %v835, %v842
        %v856 = vmul.f32 %v836, %v842
        %v857 = vmul.f32 %v837, %v842
        %v858 = vmul.f32 %v838, %v842
        %v859 = vlaneseq
        %v860 = vshrl.u32 %v859, 7
        %v861 = vsub.s32 2, %v860
        %v862 = vrot.slane %v523, %v861
        %v863 = vadd.f32 %v843, %v862
        %v864 = vadd.f32 %v844, %v862
        %v865 = vadd.f32 %v845, %v862
        %v866 = vadd.f32 %v846, %v862
        %v867 = vadd.f32 %v847, %v862
        %v868 = vadd.f32 %v848, %v862
        %v869 = vadd.f32 %v849, %v862
        %v870 = vadd.f32 %v850, %v862
        %v871 = vadd.f32 %v851, %v862
        %v872 = vadd.f32 %v852, %v862
        %v873 = vadd.f32 %v853, %v862
        %v874 = vadd.f32 %v854, %v862
        %v875 = vadd.f32 %v855, %v862
        %v876 = vadd.f32 %v856, %v862
        %v877 = vadd.f32 %v857, %v862
        %v878 = vadd.f32 %v858, %v862
        %v879 = vmax.f32 %v863, 0.0
        %v880 = vmax.f32 %v864, 0.0
        %v881 = vmax.f32 %v865, 0.0
        %v882 = vmax.f32 %v866, 0.0
        %v883 = vmax.f32 %v867, 0.0
        %v884 = vmax.f32 %v868, 0.0
        %v885 = vmax.f32 %v869, 0.0
        %v886 = vmax.f32 %v870, 0.0
        %v887 = vmax.f32 %v871, 0.0
        %v888 = vmax.f32 %v872, 0.0
        %v889 = vmax.f32 %v873, 0.0
        %v890 = vmax.f32 %v874, 0.0
        %v891 = vmax.f32 %v875, 0.0
        %v892 = vmax.f32 %v876, 0.0
        %v893 = vmax.f32 %v877, 0.0
        %v894 = vmax.f32 %v878, 0.0
        %v895 = vld [vmem:[#allocation3] sm:$0xf]
        %v896 = vld [vmem:[#allocation3 + $0x4] sm:$0xf]
        %v897 = vld [vmem:[#allocation3 + $0x8] sm:$0xf]
        %v898 = vld [vmem:[#allocation3 + $0xc] sm:$0xf]
        %v899 = vld [vmem:[#allocation3 + $0x10] sm:$0xf]
        %v900 = vld [vmem:[#allocation3 + $0x14] sm:$0xf]
        %v901 = vld [vmem:[#allocation3 + $0x18] sm:$0xf]
        %v902 = vld [vmem:[#allocation3 + $0x1c] sm:$0xf]
        %v903 = vld [vmem:[#allocation3 + $0x20] sm:$0xf]
        %v904 = vld [vmem:[#allocation3 + $0x24] sm:$0xf]
        %v905 = vld [vmem:[#allocation3 + $0x28] sm:$0xf]
        %v906 = vld [vmem:[#allocation3 + $0x2c] sm:$0xf]
        %v907 = vld [vmem:[#allocation3 + $0x30] sm:$0xf]
        %v908 = vld [vmem:[#allocation3 + $0x34] sm:$0xf]
        %v909 = vld [vmem:[#allocation3 + $0x38] sm:$0xf]
        %v910 = vld [vmem:[#allocation3 + $0x3c] sm:$0xf]
        %v911 = vpack.c.bf16 %v880, %v879
        %v912 = vpack.c.bf16 %v882, %v881
        %v913 = vpack.c.bf16 %v884, %v883
        %v914 = vpack.c.bf16 %v886, %v885
        %v915 = vpack.c.bf16 %v888, %v887
        %v916 = vpack.c.bf16 %v890, %v889
        %v917 = vpack.c.bf16 %v892, %v891
        %v918 = vpack.c.bf16 %v894, %v893
        %v935 = vunpack.c.l.b16 %v895
        %v936 = vunpack.c.l.b16 %v896
        %v937 = vunpack.c.l.b16 %v897
        %v938 = vunpack.c.l.b16 %v898
        %v939 = vunpack.c.l.b16 %v899
        %v940 = vunpack.c.l.b16 %v900
        %v941 = vunpack.c.l.b16 %v901
        %v942 = vunpack.c.l.b16 %v902
        %v943 = vunpack.c.l.b16 %v903
        %v944 = vunpack.c.l.b16 %v904
        %v945 = vunpack.c.l.b16 %v905
        %v946 = vunpack.c.l.b16 %v906
        %v947 = vunpack.c.l.b16 %v907
        %v948 = vunpack.c.l.b16 %v908
        %v949 = vunpack.c.l.b16 %v909
        %v950 = vunpack.c.l.b16 %v910
        %v951 = vpack.c.b16 %v936, %v935
        %v952 = vpack.c.b16 %v938, %v937
        %v953 = vpack.c.b16 %v940, %v939
        %v954 = vpack.c.b16 %v942, %v941
        %v955 = vpack.c.b16 %v944, %v943
        %v956 = vpack.c.b16 %v946, %v945
        %v957 = vpack.c.b16 %v948, %v947
        %v958 = vpack.c.b16 %v950, %v949
        %967 = vmatprep.subr.bf16.mxu0 0
        %968 = vmatpush1.bf16.msra.mxu0 %v951
        %969 = vmatprep.subr.bf16.mxu0 0
        %970 = vmatpush1.bf16.msra.mxu0 %v952
        %971 = vmatprep.subr.bf16.mxu0 0
        %972 = vmatpush1.bf16.msra.mxu0 %v953
        %973 = vmatprep.subr.bf16.mxu0 0
        %974 = vmatpush1.bf16.msra.mxu0 %v954
        %975 = vmatprep.subr.bf16.mxu0 0
        %976 = vmatpush1.bf16.msra.mxu0 %v955
        %977 = vmatprep.subr.bf16.mxu0 0
        %978 = vmatpush1.bf16.msra.mxu0 %v956
        %979 = vmatprep.subr.bf16.mxu0 0
        %980 = vmatpush1.bf16.msra.mxu0 %v957
        %981 = vmatprep.subr.bf16.mxu0 0
        %982 = vmatpush1.bf16.msra.mxu0 %v958
        %983 = vmatprep.subr.bf16.mxu0 0
        %984 = vmatpush1.bf16.msra.mxu0 0
        %985 = vmatprep.subr.bf16.mxu0 0
        %986 = vmatpush1.bf16.msra.mxu0 0
        %987 = vmatprep.subr.bf16.mxu0 0
        %988 = vmatpush1.bf16.msra.mxu0 0
        %989 = vmatprep.subr.bf16.mxu0 0
        %990 = vmatpush1.bf16.msra.mxu0 0
        %991 = vmatprep.subr.bf16.mxu0 0
        %992 = vmatpush1.bf16.msra.mxu0 0
        %993 = vmatprep.subr.bf16.mxu0 0
        %994 = vmatpush1.bf16.msra.mxu0 0
        %995 = vmatprep.subr.bf16.mxu0 0
        %996 = vmatpush1.bf16.msra.mxu0 0
        %997 = vmatprep.subr.bf16.mxu0 0
        %998 = vmatpush1.bf16.msra.mxu0 0
        %999 = vmatprep.mubr.bf16.mxu0 0
        %1000 = vmatmul.mubr.bf16.gmra.mrb[0].mxu0 %v911
        %v1001 = vpop.f32.mrb[0].mxu0
        %v1002 = vadd.f32 0.0, %v1001
        %v1003 = vpop.f32.mrb[0].mxu0
        %v1004 = vpop.f32.mrb[0].mxu0
        %v1005 = vadd.f32 0.0, %v1004
        %v1006 = vpop.f32.mrb[0].mxu0
        %1007 = vmatprep.mubr.bf16.mxu0 0
        %1008 = vmatmul.mubr.bf16.gmra.mrb[0].mxu0 %v912
        %v1009 = vpop.f32.mrb[0].mxu0
        %v1010 = vadd.f32 0.0, %v1009
        %v1011 = vpop.f32.mrb[0].mxu0
        %v1012 = vpop.f32.mrb[0].mxu0
        %v1013 = vadd.f32 0.0, %v1012
        %v1014 = vpop.f32.mrb[0].mxu0
        %1015 = vmatprep.mubr.bf16.mxu0 0
        %1016 = vmatmul.mubr.bf16.gmra.mrb[0].mxu0 %v913
        %v1017 = vpop.f32.mrb[0].mxu0
        %v1018 = vadd.f32 0.0, %v1017
        %v1019 = vpop.f32.mrb[0].mxu0
        %v1020 = vpop.f32.mrb[0].mxu0
        %v1021 = vadd.f32 0.0, %v1020
        %v1022 = vpop.f32.mrb[0].mxu0
        %1023 = vmatprep.mubr.bf16.mxu0 0
        %1024 = vmatmul.mubr.bf16.gmra.mrb[0].mxu0 %v914
        %v1025 = vpop.f32.mrb[0].mxu0
        %v1026 = vadd.f32 0.0, %v1025
        %v1027 = vpop.f32.mrb[0].mxu0
        %v1028 = vpop.f32.mrb[0].mxu0
        %v1029 = vadd.f32 0.0, %v1028
        %v1030 = vpop.f32.mrb[0].mxu0
        %1031 = vmatprep.mubr.bf16.mxu0 0
        %1032 = vmatmul.mubr.bf16.gmra.mrb[0].mxu0 %v915
        %v1033 = vpop.f32.mrb[0].mxu0
        %v1034 = vadd.f32 0.0, %v1033
        %v1035 = vpop.f32.mrb[0].mxu0
        %v1036 = vpop.f32.mrb[0].mxu0
        %v1037 = vadd.f32 0.0, %v1036
        %v1038 = vpop.f32.mrb[0].mxu0
        %1039 = vmatprep.mubr.bf16.mxu0 0
        %1040 = vmatmul.mubr.bf16.gmra.mrb[0].mxu0 %v916
        %v1041 = vpop.f32.mrb[0].mxu0
        %v1042 = vadd.f32 0.0, %v1041
        %v1043 = vpop.f32.mrb[0].mxu0
        %v1044 = vpop.f32.mrb[0].mxu0
        %v1045 = vadd.f32 0.0, %v1044
        %v1046 = vpop.f32.mrb[0].mxu0
        %1047 = vmatprep.mubr.bf16.mxu0 0
        %1048 = vmatmul.mubr.bf16.gmra.mrb[0].mxu0 %v917
        %v1049 = vpop.f32.mrb[0].mxu0
        %v1050 = vadd.f32 0.0, %v1049
        %v1051 = vpop.f32.mrb[0].mxu0
        %v1052 = vpop.f32.mrb[0].mxu0
        %v1053 = vadd.f32 0.0, %v1052
        %v1054 = vpop.f32.mrb[0].mxu0
        %1055 = vmatprep.mubr.bf16.mxu0 0
        %1056 = vmatmul.mubr.bf16.gmra.mrb[0].mxu0 %v918
        %v1057 = vpop.f32.mrb[0].mxu0
        %v1058 = vadd.f32 0.0, %v1057
        %v1059 = vpop.f32.mrb[0].mxu0
        %v1060 = vpop.f32.mrb[0].mxu0
        %v1061 = vadd.f32 0.0, %v1060
        %v1062 = vpop.f32.mrb[0].mxu0
        %1063 = vdwg.mxu0
        %v1064 = vpack.c.bf16 %v1005, %v1002
        %v1065 = vpack.c.bf16 %v1013, %v1010
        %v1066 = vpack.c.bf16 %v1021, %v1018
        %v1067 = vpack.c.bf16 %v1029, %v1026
        %v1068 = vpack.c.bf16 %v1037, %v1034
        %v1069 = vpack.c.bf16 %v1045, %v1042
        %v1070 = vpack.c.bf16 %v1053, %v1050
        %v1071 = vpack.c.bf16 %v1061, %v1058
        %s1072 = scalar_lea.vmem %s4, 4
        %v1073 = vld [vmem:[%s1072] sm:$0x7]
        %v1074 = vlaneseq
        %v1075 = vshrl.u32 %v1074, 7
        %v1076 = vsub.s32 0, %v1075
        %v1077 = vrot.slane %v1073, %v1076
        %1078 = vmatprep.subr.bf16.mxu0 0
        %1079 = vmatpush1.bf16.msra.mxu0 %v1064
        %1080 = vmatprep.subr.bf16.mxu0 0
        %1081 = vmatpush1.bf16.msra.mxu0 %v1065
        %1082 = vmatprep.subr.bf16.mxu0 0
        %1083 = vmatpush1.bf16.msra.mxu0 %v1066
        %1084 = vmatprep.subr.bf16.mxu0 0
        %1085 = vmatpush1.bf16.msra.mxu0 %v1067
        %1086 = vmatprep.subr.bf16.mxu0 0
        %1087 = vmatpush1.bf16.msra.mxu0 %v1068
        %1088 = vmatprep.subr.bf16.mxu0 0
        %1089 = vmatpush1.bf16.msra.mxu0 %v1069
        %1090 = vmatprep.subr.bf16.mxu0 0
        %1091 = vmatpush1.bf16.msra.mxu0 %v1070
        %1092 = vmatprep.subr.bf16.mxu0 0
        %1093 = vmatpush1.bf16.msra.mxu0 %v1071
        %1094 = vmatprep.subr.bf16.mxu0 0
        %1095 = vmatpush1.bf16.msra.mxu0 0
        %1096 = vmatprep.subr.bf16.mxu0 0
        %1097 = vmatpush1.bf16.msra.mxu0 0
        %1098 = vmatprep.subr.bf16.mxu0 0
        %1099 = vmatpush1.bf16.msra.mxu0 0
        %1100 = vmatprep.subr.bf16.mxu0 0
        %1101 = vmatpush1.bf16.msra.mxu0 0
        %1102 = vmatprep.subr.bf16.mxu0 0
        %1103 = vmatpush1.bf16.msra.mxu0 0
        %1104 = vmatprep.subr.bf16.mxu0 0
        %1105 = vmatpush1.bf16.msra.mxu0 0
        %1106 = vmatprep.subr.bf16.mxu0 0
        %1107 = vmatpush1.bf16.msra.mxu0 0
        %1108 = vmatprep.subr.bf16.mxu0 0
        %1109 = vmatpush1.bf16.msra.mxu0 0
        %1110 = vmatprep.mubr.bf16.mxu0 0
        %1111 = vmatmul.mubr.bf16.gmra.mrb[0].mxu0 %v354
        %v1112 = vpop.f32.mrb[0].mxu0
        %v1113 = vadd.f32 %v1077, %v1112
        %v1114 = vpop.f32.mrb[0].mxu0
        %v1115 = vpop.f32.mrb[0].mxu0
        %v1116 = vadd.f32 %v1077, %v1115
        %v1117 = vpop.f32.mrb[0].mxu0
        %1118 = vmatprep.mubr.bf16.mxu0 0
        %1119 = vmatmul.mubr.bf16.gmra.mrb[0].mxu0 %v355
        %v1120 = vpop.f32.mrb[0].mxu0
        %v1121 = vadd.f32 %v1077, %v1120
        %v1122 = vpop.f32.mrb[0].mxu0
        %v1123 = vpop.f32.mrb[0].mxu0
        %v1124 = vadd.f32 %v1077, %v1123
        %v1125 = vpop.f32.mrb[0].mxu0
        %1126 = vmatprep.mubr.bf16.mxu0 0
        %1127 = vmatmul.mubr.bf16.gmra.mrb[0].mxu0 %v356
        %v1128 = vpop.f32.mrb[0].mxu0
        %v1129 = vadd.f32 %v1077, %v1128
        %v1130 = vpop.f32.mrb[0].mxu0
        %v1131 = vpop.f32.mrb[0].mxu0
        %v1132 = vadd.f32 %v1077, %v1131
        %v1133 = vpop.f32.mrb[0].mxu0
        %1134 = vmatprep.mubr.bf16.mxu0 0
        %1135 = vmatmul.mubr.bf16.gmra.mrb[0].mxu0 %v357
        %v1136 = vpop.f32.mrb[0].mxu0
        %v1137 = vadd.f32 %v1077, %v1136
        %v1138 = vpop.f32.mrb[0].mxu0
        %v1139 = vpop.f32.mrb[0].mxu0
        %v1140 = vadd.f32 %v1077, %v1139
        %v1141 = vpop.f32.mrb[0].mxu0
        %1142 = vmatprep.mubr.bf16.mxu0 0
        %1143 = vmatmul.mubr.bf16.gmra.mrb[0].mxu0 %v358
        %v1144 = vpop.f32.mrb[0].mxu0
        %v1145 = vadd.f32 %v1077, %v1144
        %v1146 = vpop.f32.mrb[0].mxu0
        %v1147 = vpop.f32.mrb[0].mxu0
        %v1148 = vadd.f32 %v1077, %v1147
        %v1149 = vpop.f32.mrb[0].mxu0
        %1150 = vmatprep.mubr.bf16.mxu0 0
        %1151 = vmatmul.mubr.bf16.gmra.mrb[0].mxu0 %v359
        %v1152 = vpop.f32.mrb[0].mxu0
        %v1153 = vadd.f32 %v1077, %v1152
        %v1154 = vpop.f32.mrb[0].mxu0
        %v1155 = vpop.f32.mrb[0].mxu0
        %v1156 = vadd.f32 %v1077, %v1155
        %v1157 = vpop.f32.mrb[0].mxu0
        %1158 = vmatprep.mubr.bf16.mxu0 0
        %1159 = vmatmul.mubr.bf16.gmra.mrb[0].mxu0 %v360
        %v1160 = vpop.f32.mrb[0].mxu0
        %v1161 = vadd.f32 %v1077, %v1160
        %v1162 = vpop.f32.mrb[0].mxu0
        %v1163 = vpop.f32.mrb[0].mxu0
        %v1164 = vadd.f32 %v1077, %v1163
        %v1165 = vpop.f32.mrb[0].mxu0
        %1166 = vmatprep.mubr.bf16.mxu0 0
        %1167 = vmatmul.mubr.bf16.gmra.mrb[0].mxu0 %v361
        %v1168 = vpop.f32.mrb[0].mxu0
        %v1169 = vadd.f32 %v1077, %v1168
        %v1170 = vpop.f32.mrb[0].mxu0
        %v1171 = vpop.f32.mrb[0].mxu0
        %v1172 = vadd.f32 %v1077, %v1171
        %v1173 = vpop.f32.mrb[0].mxu0
        %1174 = vdwg.mxu0
        %1175 = vadd.xlane.f32.xlu0 %v1113
        %v1176 = vpop.xlane.xlu0 %1175
        %1177 = vadd.xlane.f32.xlu0 %v1116
        %v1178 = vpop.xlane.xlu0 %1177
        %1179 = vadd.xlane.f32.xlu0 %v1121
        %v1180 = vpop.xlane.xlu0 %1179
        %1181 = vadd.xlane.f32.xlu0 %v1124
        %v1182 = vpop.xlane.xlu0 %1181
        %1183 = vadd.xlane.f32.xlu0 %v1129
        %v1184 = vpop.xlane.xlu0 %1183
        %1185 = vadd.xlane.f32.xlu0 %v1132
        %v1186 = vpop.xlane.xlu0 %1185
        %1187 = vadd.xlane.f32.xlu0 %v1137
        %v1188 = vpop.xlane.xlu0 %1187
        %1189 = vadd.xlane.f32.xlu0 %v1140
        %v1190 = vpop.xlane.xlu0 %1189
        %1191 = vadd.xlane.f32.xlu0 %v1145
        %v1192 = vpop.xlane.xlu0 %1191
        %1193 = vadd.xlane.f32.xlu0 %v1148
        %v1194 = vpop.xlane.xlu0 %1193
        %1195 = vadd.xlane.f32.xlu0 %v1153
        %v1196 = vpop.xlane.xlu0 %1195
        %1197 = vadd.xlane.f32.xlu0 %v1156
        %v1198 = vpop.xlane.xlu0 %1197
        %1199 = vadd.xlane.f32.xlu0 %v1161
        %v1200 = vpop.xlane.xlu0 %1199
        %1201 = vadd.xlane.f32.xlu0 %v1164
        %v1202 = vpop.xlane.xlu0 %1201
        %1203 = vadd.xlane.f32.xlu0 %v1169
        %v1204 = vpop.xlane.xlu0 %1203
        %1205 = vadd.xlane.f32.xlu0 %v1172
        %v1206 = vpop.xlane.xlu0 %1205
        %v1207 = vmul.f32 %v1176, %v694
        %v1208 = vmul.f32 %v1178, %v694
        %v1209 = vmul.f32 %v1180, %v694
        %v1210 = vmul.f32 %v1182, %v694
        %v1211 = vmul.f32 %v1184, %v694
        %v1212 = vmul.f32 %v1186, %v694
        %v1213 = vmul.f32 %v1188, %v694
        %v1214 = vmul.f32 %v1190, %v694
        %v1215 = vmul.f32 %v1192, %v694
        %v1216 = vmul.f32 %v1194, %v694
        %v1217 = vmul.f32 %v1196, %v694
        %v1218 = vmul.f32 %v1198, %v694
        %v1219 = vmul.f32 %v1200, %v694
        %v1220 = vmul.f32 %v1202, %v694
        %v1221 = vmul.f32 %v1204, %v694
        %v1222 = vmul.f32 %v1206, %v694
        %v1223 = vsub.f32 %v1113, %v1207
        %v1224 = vsub.f32 %v1116, %v1208
        %v1225 = vsub.f32 %v1121, %v1209
        %v1226 = vsub.f32 %v1124, %v1210
        %v1227 = vsub.f32 %v1129, %v1211
        %v1228 = vsub.f32 %v1132, %v1212
        %v1229 = vsub.f32 %v1137, %v1213
        %v1230 = vsub.f32 %v1140, %v1214
        %v1231 = vsub.f32 %v1145, %v1215
        %v1232 = vsub.f32 %v1148, %v1216
        %v1233 = vsub.f32 %v1153, %v1217
        %v1234 = vsub.f32 %v1156, %v1218
        %v1235 = vsub.f32 %v1161, %v1219
        %v1236 = vsub.f32 %v1164, %v1220
        %v1237 = vsub.f32 %v1169, %v1221
        %v1238 = vsub.f32 %v1172, %v1222
        %v1239 = vmul.f32 %v1223, %v1223
        %v1240 = vmul.f32 %v1224, %v1224
        %v1241 = vmul.f32 %v1225, %v1225
        %v1242 = vmul.f32 %v1226, %v1226
        %v1243 = vmul.f32 %v1227, %v1227
        %v1244 = vmul.f32 %v1228, %v1228
        %v1245 = vmul.f32 %v1229, %v1229
        %v1246 = vmul.f32 %v1230, %v1230
        %v1247 = vmul.f32 %v1231, %v1231
        %v1248 = vmul.f32 %v1232, %v1232
        %v1249 = vmul.f32 %v1233, %v1233
        %v1250 = vmul.f32 %v1234, %v1234
        %v1251 = vmul.f32 %v1235, %v1235
        %v1252 = vmul.f32 %v1236, %v1236
        %v1253 = vmul.f32 %v1237, %v1237
        %v1254 = vmul.f32 %v1238, %v1238
        %1255 = vadd.xlane.f32.xlu0 %v1239
        %v1256 = vpop.xlane.xlu0 %1255
        %1257 = vadd.xlane.f32.xlu0 %v1240
        %v1258 = vpop.xlane.xlu0 %1257
        %1259 = vadd.xlane.f32.xlu0 %v1241
        %v1260 = vpop.xlane.xlu0 %1259
        %1261 = vadd.xlane.f32.xlu0 %v1242
        %v1262 = vpop.xlane.xlu0 %1261
        %1263 = vadd.xlane.f32.xlu0 %v1243
        %v1264 = vpop.xlane.xlu0 %1263
        %1265 = vadd.xlane.f32.xlu0 %v1244
        %v1266 = vpop.xlane.xlu0 %1265
        %1267 = vadd.xlane.f32.xlu0 %v1245
        %v1268 = vpop.xlane.xlu0 %1267
        %1269 = vadd.xlane.f32.xlu0 %v1246
        %v1270 = vpop.xlane.xlu0 %1269
        %1271 = vadd.xlane.f32.xlu0 %v1247
        %v1272 = vpop.xlane.xlu0 %1271
        %1273 = vadd.xlane.f32.xlu0 %v1248
        %v1274 = vpop.xlane.xlu0 %1273
        %1275 = vadd.xlane.f32.xlu0 %v1249
        %v1276 = vpop.xlane.xlu0 %1275
        %1277 = vadd.xlane.f32.xlu0 %v1250
        %v1278 = vpop.xlane.xlu0 %1277
        %1279 = vadd.xlane.f32.xlu0 %v1251
        %v1280 = vpop.xlane.xlu0 %1279
        %1281 = vadd.xlane.f32.xlu0 %v1252
        %v1282 = vpop.xlane.xlu0 %1281
        %1283 = vadd.xlane.f32.xlu0 %v1253
        %v1284 = vpop.xlane.xlu0 %1283
        %1285 = vadd.xlane.f32.xlu0 %v1254
        %v1286 = vpop.xlane.xlu0 %1285
        %v1287 = vmul.f32 %v1256, %v694
        %v1288 = vmul.f32 %v1258, %v694
        %v1289 = vmul.f32 %v1260, %v694
        %v1290 = vmul.f32 %v1262, %v694
        %v1291 = vmul.f32 %v1264, %v694
        %v1292 = vmul.f32 %v1266, %v694
        %v1293 = vmul.f32 %v1268, %v694
        %v1294 = vmul.f32 %v1270, %v694
        %v1295 = vmul.f32 %v1272, %v694
        %v1296 = vmul.f32 %v1274, %v694
        %v1297 = vmul.f32 %v1276, %v694
        %v1298 = vmul.f32 %v1278, %v694
        %v1299 = vmul.f32 %v1280, %v694
        %v1300 = vmul.f32 %v1282, %v694
        %v1301 = vmul.f32 %v1284, %v694
        %v1302 = vmul.f32 %v1286, %v694
        %v1303 = vadd.f32 %v1287, 1e-05
        %v1304 = vadd.f32 %v1288, 1e-05
        %v1305 = vadd.f32 %v1289, 1e-05
        %v1306 = vadd.f32 %v1290, 1e-05
        %v1307 = vadd.f32 %v1291, 1e-05
        %v1308 = vadd.f32 %v1292, 1e-05
        %v1309 = vadd.f32 %v1293, 1e-05
        %v1310 = vadd.f32 %v1294, 1e-05
        %v1311 = vadd.f32 %v1295, 1e-05
        %v1312 = vadd.f32 %v1296, 1e-05
        %v1313 = vadd.f32 %v1297, 1e-05
        %v1314 = vadd.f32 %v1298, 1e-05
        %v1315 = vadd.f32 %v1299, 1e-05
        %v1316 = vadd.f32 %v1300, 1e-05
        %v1317 = vadd.f32 %v1301, 1e-05
        %v1318 = vadd.f32 %v1302, 1e-05
        %v1319 = vrsqrt.pop %v1303
        %v1320 = vrsqrt.pop %v1304
        %v1321 = vrsqrt.pop %v1305
        %v1322 = vrsqrt.pop %v1306
        %v1323 = vrsqrt.pop %v1307
        %v1324 = vrsqrt.pop %v1308
        %v1325 = vrsqrt.pop %v1309
        %v1326 = vrsqrt.pop %v1310
        %v1327 = vrsqrt.pop %v1311
        %v1328 = vrsqrt.pop %v1312
        %v1329 = vrsqrt.pop %v1313
        %v1330 = vrsqrt.pop %v1314
        %v1331 = vrsqrt.pop %v1315
        %v1332 = vrsqrt.pop %v1316
        %v1333 = vrsqrt.pop %v1317
        %v1334 = vrsqrt.pop %v1318
        %v1335 = vmul.f32 %v1223, %v1319
        %v1336 = vmul.f32 %v1224, %v1320
        %v1337 = vmul.f32 %v1225, %v1321
        %v1338 = vmul.f32 %v1226, %v1322
        %v1339 = vmul.f32 %v1227, %v1323
        %v1340 = vmul.f32 %v1228, %v1324
        %v1341 = vmul.f32 %v1229, %v1325
        %v1342 = vmul.f32 %v1230, %v1326
        %v1343 = vmul.f32 %v1231, %v1327
        %v1344 = vmul.f32 %v1232, %v1328
        %v1345 = vmul.f32 %v1233, %v1329
        %v1346 = vmul.f32 %v1234, %v1330
        %v1347 = vmul.f32 %v1235, %v1331
        %v1348 = vmul.f32 %v1236, %v1332
        %v1349 = vmul.f32 %v1237, %v1333
        %v1350 = vmul.f32 %v1238, %v1334
        %v1351 = vlaneseq
        %v1352 = vshrl.u32 %v1351, 7
        %v1353 = vsub.s32 1, %v1352
        %v1354 = vrot.slane %v1073, %v1353
        %v1355 = vmul.f32 %v1335, %v1354
        %v1356 = vmul.f32 %v1336, %v1354
        %v1357 = vmul.f32 %v1337, %v1354
        %v1358 = vmul.f32 %v1338, %v1354
        %v1359 = vmul.f32 %v1339, %v1354
        %v1360 = vmul.f32 %v1340, %v1354
        %v1361 = vmul.f32 %v1341, %v1354
        %v1362 = vmul.f32 %v1342, %v1354
        %v1363 = vmul.f32 %v1343, %v1354
        %v1364 = vmul.f32 %v1344, %v1354
        %v1365 = vmul.f32 %v1345, %v1354
        %v1366 = vmul.f32 %v1346, %v1354
        %v1367 = vmul.f32 %v1347, %v1354
        %v1368 = vmul.f32 %v1348, %v1354
        %v1369 = vmul.f32 %v1349, %v1354
        %v1370 = vmul.f32 %v1350, %v1354
        %v1371 = vlaneseq
        %v1372 = vshrl.u32 %v1371, 7
        %v1373 = vsub.s32 2, %v1372
        %v1374 = vrot.slane %v1073, %v1373
        %v1375 = vadd.f32 %v1355, %v1374
        %v1376 = vadd.f32 %v1356, %v1374
        %v1377 = vadd.f32 %v1357, %v1374
        %v1378 = vadd.f32 %v1358, %v1374
        %v1379 = vadd.f32 %v1359, %v1374
        %v1380 = vadd.f32 %v1360, %v1374
        %v1381 = vadd.f32 %v1361, %v1374
        %v1382 = vadd.f32 %v1362, %v1374
        %v1383 = vadd.f32 %v1363, %v1374
        %v1384 = vadd.f32 %v1364, %v1374
        %v1385 = vadd.f32 %v1365, %v1374
        %v1386 = vadd.f32 %v1366, %v1374
        %v1387 = vadd.f32 %v1367, %v1374
        %v1388 = vadd.f32 %v1368, %v1374
        %v1389 = vadd.f32 %v1369, %v1374
        %v1390 = vadd.f32 %v1370, %v1374
        %v1391 = vmax.f32 %v1375, 0.0
        %v1392 = vmax.f32 %v1376, 0.0
        %v1393 = vmax.f32 %v1377, 0.0
        %v1394 = vmax.f32 %v1378, 0.0
        %v1395 = vmax.f32 %v1379, 0.0
        %v1396 = vmax.f32 %v1380, 0.0
        %v1397 = vmax.f32 %v1381, 0.0
        %v1398 = vmax.f32 %v1382, 0.0
        %v1399 = vmax.f32 %v1383, 0.0
        %v1400 = vmax.f32 %v1384, 0.0
        %v1401 = vmax.f32 %v1385, 0.0
        %v1402 = vmax.f32 %v1386, 0.0
        %v1403 = vmax.f32 %v1387, 0.0
        %v1404 = vmax.f32 %v1388, 0.0
        %v1405 = vmax.f32 %v1389, 0.0
        %v1406 = vmax.f32 %v1390, 0.0
        %s1407 = scalar_lea.vmem [#allocation3], 64
        %v1408 = vld [vmem:[%s1407] sm:$0xf]
        %v1409 = vld [vmem:[%s1407 + $0x4] sm:$0xf]
        %v1410 = vld [vmem:[%s1407 + $0x8] sm:$0xf]
        %v1411 = vld [vmem:[%s1407 + $0xc] sm:$0xf]
        %v1412 = vld [vmem:[%s1407 + $0x10] sm:$0xf]
        %v1413 = vld [vmem:[%s1407 + $0x14] sm:$0xf]
        %v1414 = vld [vmem:[%s1407 + $0x18] sm:$0xf]
        %v1415 = vld [vmem:[%s1407 + $0x1c] sm:$0xf]
        %v1416 = vld [vmem:[%s1407 + $0x20] sm:$0xf]
        %v1417 = vld [vmem:[%s1407 + $0x24] sm:$0xf]
        %v1418 = vld [vmem:[%s1407 + $0x28] sm:$0xf]
        %v1419 = vld [vmem:[%s1407 + $0x2c] sm:$0xf]
        %v1420 = vld [vmem:[%s1407 + $0x30] sm:$0xf]
        %v1421 = vld [vmem:[%s1407 + $0x34] sm:$0xf]
        %v1422 = vld [vmem:[%s1407 + $0x38] sm:$0xf]
        %v1423 = vld [vmem:[%s1407 + $0x3c] sm:$0xf]
        %v1424 = vpack.c.bf16 %v1392, %v1391
        %v1425 = vpack.c.bf16 %v1394, %v1393
        %v1426 = vpack.c.bf16 %v1396, %v1395
        %v1427 = vpack.c.bf16 %v1398, %v1397
        %v1428 = vpack.c.bf16 %v1400, %v1399
        %v1429 = vpack.c.bf16 %v1402, %v1401
        %v1430 = vpack.c.bf16 %v1404, %v1403
        %v1431 = vpack.c.bf16 %v1406, %v1405
        %v1448 = vunpack.c.l.b16 %v1408
        %v1449 = vunpack.c.l.b16 %v1409
        %v1450 = vunpack.c.l.b16 %v1410
        %v1451 = vunpack.c.l.b16 %v1411
        %v1452 = vunpack.c.l.b16 %v1412
        %v1453 = vunpack.c.l.b16 %v1413
        %v1454 = vunpack.c.l.b16 %v1414
        %v1455 = vunpack.c.l.b16 %v1415
        %v1456 = vunpack.c.l.b16 %v1416
        %v1457 = vunpack.c.l.b16 %v1417
        %v1458 = vunpack.c.l.b16 %v1418
        %v1459 = vunpack.c.l.b16 %v1419
        %v1460 = vunpack.c.l.b16 %v1420
        %v1461 = vunpack.c.l.b16 %v1421
        %v1462 = vunpack.c.l.b16 %v1422
        %v1463 = vunpack.c.l.b16 %v1423
        %v1464 = vpack.c.b16 %v1449, %v1448
        %v1465 = vpack.c.b16 %v1451, %v1450
        %v1466 = vpack.c.b16 %v1453, %v1452
        %v1467 = vpack.c.b16 %v1455, %v1454
        %v1468 = vpack.c.b16 %v1457, %v1456
        %v1469 = vpack.c.b16 %v1459, %v1458
        %v1470 = vpack.c.b16 %v1461, %v1460
        %v1471 = vpack.c.b16 %v1463, %v1462
        %1480 = vmatprep.subr.bf16.mxu0 0
        %1481 = vmatpush1.bf16.msra.mxu0 %v1464
        %1482 = vmatprep.subr.bf16.mxu0 0
        %1483 = vmatpush1.bf16.msra.mxu0 %v1465
        %1484 = vmatprep.subr.bf16.mxu0 0
        %1485 = vmatpush1.bf16.msra.mxu0 %v1466
        %1486 = vmatprep.subr.bf16.mxu0 0
        %1487 = vmatpush1.bf16.msra.mxu0 %v1467
        %1488 = vmatprep.subr.bf16.mxu0 0
        %1489 = vmatpush1.bf16.msra.mxu0 %v1468
        %1490 = vmatprep.subr.bf16.mxu0 0
        %1491 = vmatpush1.bf16.msra.mxu0 %v1469
        %1492 = vmatprep.subr.bf16.mxu0 0
        %1493 = vmatpush1.bf16.msra.mxu0 %v1470
        %1494 = vmatprep.subr.bf16.mxu0 0
        %1495 = vmatpush1.bf16.msra.mxu0 %v1471
        %1496 = vmatprep.subr.bf16.mxu0 0
        %1497 = vmatpush1.bf16.msra.mxu0 0
        %1498 = vmatprep.subr.bf16.mxu0 0
        %1499 = vmatpush1.bf16.msra.mxu0 0
        %1500 = vmatprep.subr.bf16.mxu0 0
        %1501 = vmatpush1.bf16.msra.mxu0 0
        %1502 = vmatprep.subr.bf16.mxu0 0
        %1503 = vmatpush1.bf16.msra.mxu0 0
        %1504 = vmatprep.subr.bf16.mxu0 0
        %1505 = vmatpush1.bf16.msra.mxu0 0
        %1506 = vmatprep.subr.bf16.mxu0 0
        %1507 = vmatpush1.bf16.msra.mxu0 0
        %1508 = vmatprep.subr.bf16.mxu0 0
        %1509 = vmatpush1.bf16.msra.mxu0 0
        %1510 = vmatprep.subr.bf16.mxu0 0
        %1511 = vmatpush1.bf16.msra.mxu0 0
        %1512 = vmatprep.mubr.bf16.mxu0 0
        %1513 = vmatmul.mubr.bf16.gmra.mrb[0].mxu0 %v1424
        %v1514 = vpop.f32.mrb[0].mxu0
        %v1515 = vadd.f32 0.0, %v1514
        %v1516 = vpop.f32.mrb[0].mxu0
        %v1517 = vpop.f32.mrb[0].mxu0
        %v1518 = vadd.f32 0.0, %v1517
        %v1519 = vpop.f32.mrb[0].mxu0
        %1520 = vmatprep.mubr.bf16.mxu0 0
        %1521 = vmatmul.mubr.bf16.gmra.mrb[0].mxu0 %v1425
        %v1522 = vpop.f32.mrb[0].mxu0
        %v1523 = vadd.f32 0.0, %v1522
        %v1524 = vpop.f32.mrb[0].mxu0
        %v1525 = vpop.f32.mrb[0].mxu0
        %v1526 = vadd.f32 0.0, %v1525
        %v1527 = vpop.f32.mrb[0].mxu0
        %1528 = vmatprep.mubr.bf16.mxu0 0
        %1529 = vmatmul.mubr.bf16.gmra.mrb[0].mxu0 %v1426
        %v1530 = vpop.f32.mrb[0].mxu0
        %v1531 = vadd.f32 0.0, %v1530
        %v1532 = vpop.f32.mrb[0].mxu0
        %v1533 = vpop.f32.mrb[0].mxu0
        %v1534 = vadd.f32 0.0, %v1533
        %v1535 = vpop.f32.mrb[0].mxu0
        %1536 = vmatprep.mubr.bf16.mxu0 0
        %1537 = vmatmul.mubr.bf16.gmra.mrb[0].mxu0 %v1427
        %v1538 = vpop.f32.mrb[0].mxu0
        %v1539 = vadd.f32 0.0, %v1538
        %v1540 = vpop.f32.mrb[0].mxu0
        %v1541 = vpop.f32.mrb[0].mxu0
        %v1542 = vadd.f32 0.0, %v1541
        %v1543 = vpop.f32.mrb[0].mxu0
        %1544 = vmatprep.mubr.bf16.mxu0 0
        %1545 = vmatmul.mubr.bf16.gmra.mrb[0].mxu0 %v1428
        %v1546 = vpop.f32.mrb[0].mxu0
        %v1547 = vadd.f32 0.0, %v1546
        %v1548 = vpop.f32.mrb[0].mxu0
        %v1549 = vpop.f32.mrb[0].mxu0
        %v1550 = vadd.f32 0.0, %v1549
        %v1551 = vpop.f32.mrb[0].mxu0
        %1552 = vmatprep.mubr.bf16.mxu0 0
        %1553 = vmatmul.mubr.bf16.gmra.mrb[0].mxu0 %v1429
        %v1554 = vpop.f32.mrb[0].mxu0
        %v1555 = vadd.f32 0.0, %v1554
        %v1556 = vpop.f32.mrb[0].mxu0
        %v1557 = vpop.f32.mrb[0].mxu0
        %v1558 = vadd.f32 0.0, %v1557
        %v1559 = vpop.f32.mrb[0].mxu0
        %1560 = vmatprep.mubr.bf16.mxu0 0
        %1561 = vmatmul.mubr.bf16.gmra.mrb[0].mxu0 %v1430
        %v1562 = vpop.f32.mrb[0].mxu0
        %v1563 = vadd.f32 0.0, %v1562
        %v1564 = vpop.f32.mrb[0].mxu0
        %v1565 = vpop.f32.mrb[0].mxu0
        %v1566 = vadd.f32 0.0, %v1565
        %v1567 = vpop.f32.mrb[0].mxu0
        %1568 = vmatprep.mubr.bf16.mxu0 0
        %1569 = vmatmul.mubr.bf16.gmra.mrb[0].mxu0 %v1431
        %v1570 = vpop.f32.mrb[0].mxu0
        %v1571 = vadd.f32 0.0, %v1570
        %v1572 = vpop.f32.mrb[0].mxu0
        %v1573 = vpop.f32.mrb[0].mxu0
        %v1574 = vadd.f32 0.0, %v1573
        %v1575 = vpop.f32.mrb[0].mxu0
        %1576 = vdwg.mxu0
        %v1577 = vpack.c.bf16 %v1518, %v1515
        %v1578 = vpack.c.bf16 %v1526, %v1523
        %v1579 = vpack.c.bf16 %v1534, %v1531
        %v1580 = vpack.c.bf16 %v1542, %v1539
        %v1581 = vpack.c.bf16 %v1550, %v1547
        %v1582 = vpack.c.bf16 %v1558, %v1555
        %v1583 = vpack.c.bf16 %v1566, %v1563
        %v1584 = vpack.c.bf16 %v1574, %v1571
        %s1585 = scalar_lea.vmem %s4, 8
        %v1586 = vld [vmem:[%s1585] sm:$0x7]
        %v1587 = vlaneseq
        %v1588 = vshrl.u32 %v1587, 7
        %v1589 = vsub.s32 0, %v1588
        %v1590 = vrot.slane %v1586, %v1589
        %1591 = vmatprep.subr.bf16.mxu0 0
        %1592 = vmatpush1.bf16.msra.mxu0 %v1577
        %1593 = vmatprep.subr.bf16.mxu0 0
        %1594 = vmatpush1.bf16.msra.mxu0 %v1578
        %1595 = vmatprep.subr.bf16.mxu0 0
        %1596 = vmatpush1.bf16.msra.mxu0 %v1579
        %1597 = vmatprep.subr.bf16.mxu0 0
        %1598 = vmatpush1.bf16.msra.mxu0 %v1580
        %1599 = vmatprep.subr.bf16.mxu0 0
        %1600 = vmatpush1.bf16.msra.mxu0 %v1581
        %1601 = vmatprep.subr.bf16.mxu0 0
        %1602 = vmatpush1.bf16.msra.mxu0 %v1582
        %1603 = vmatprep.subr.bf16.mxu0 0
        %1604 = vmatpush1.bf16.msra.mxu0 %v1583
        %1605 = vmatprep.subr.bf16.mxu0 0
        %1606 = vmatpush1.bf16.msra.mxu0 %v1584
        %1607 = vmatprep.subr.bf16.mxu0 0
        %1608 = vmatpush1.bf16.msra.mxu0 0
        %1609 = vmatprep.subr.bf16.mxu0 0
        %1610 = vmatpush1.bf16.msra.mxu0 0
        %1611 = vmatprep.subr.bf16.mxu0 0
        %1612 = vmatpush1.bf16.msra.mxu0 0
        %1613 = vmatprep.subr.bf16.mxu0 0
        %1614 = vmatpush1.bf16.msra.mxu0 0
        %1615 = vmatprep.subr.bf16.mxu0 0
        %1616 = vmatpush1.bf16.msra.mxu0 0
        %1617 = vmatprep.subr.bf16.mxu0 0
        %1618 = vmatpush1.bf16.msra.mxu0 0
        %1619 = vmatprep.subr.bf16.mxu0 0
        %1620 = vmatpush1.bf16.msra.mxu0 0
        %1621 = vmatprep.subr.bf16.mxu0 0
        %1622 = vmatpush1.bf16.msra.mxu0 0
        %1623 = vmatprep.mubr.bf16.mxu0 0
        %1624 = vmatmul.mubr.bf16.gmra.mrb[0].mxu0 %v354
        %v1625 = vpop.f32.mrb[0].mxu0
        %v1626 = vadd.f32 %v1590, %v1625
        %v1627 = vpop.f32.mrb[0].mxu0
        %v1628 = vpop.f32.mrb[0].mxu0
        %v1629 = vadd.f32 %v1590, %v1628
        %v1630 = vpop.f32.mrb[0].mxu0
        %1631 = vmatprep.mubr.bf16.mxu0 0
        %1632 = vmatmul.mubr.bf16.gmra.mrb[0].mxu0 %v355
        %v1633 = vpop.f32.mrb[0].mxu0
        %v1634 = vadd.f32 %v1590, %v1633
        %v1635 = vpop.f32.mrb[0].mxu0
        %v1636 = vpop.f32.mrb[0].mxu0
        %v1637 = vadd.f32 %v1590, %v1636
        %v1638 = vpop.f32.mrb[0].mxu0
        %1639 = vmatprep.mubr.bf16.mxu0 0
        %1640 = vmatmul.mubr.bf16.gmra.mrb[0].mxu0 %v356
        %v1641 = vpop.f32.mrb[0].mxu0
        %v1642 = vadd.f32 %v1590, %v1641
        %v1643 = vpop.f32.mrb[0].mxu0
        %v1644 = vpop.f32.mrb[0].mxu0
        %v1645 = vadd.f32 %v1590, %v1644
        %v1646 = vpop.f32.mrb[0].mxu0
        %1647 = vmatprep.mubr.bf16.mxu0 0
        %1648 = vmatmul.mubr.bf16.gmra.mrb[0].mxu0 %v357
        %v1649 = vpop.f32.mrb[0].mxu0
        %v1650 = vadd.f32 %v1590, %v1649
        %v1651 = vpop.f32.mrb[0].mxu0
        %v1652 = vpop.f32.mrb[0].mxu0
        %v1653 = vadd.f32 %v1590, %v1652
        %v1654 = vpop.f32.mrb[0].mxu0
        %1655 = vmatprep.mubr.bf16.mxu0 0
        %1656 = vmatmul.mubr.bf16.gmra.mrb[0].mxu0 %v358
        %v1657 = vpop.f32.mrb[0].mxu0
        %v1658 = vadd.f32 %v1590, %v1657
        %v1659 = vpop.f32.mrb[0].mxu0
        %v1660 = vpop.f32.mrb[0].mxu0
        %v1661 = vadd.f32 %v1590, %v1660
        %v1662 = vpop.f32.mrb[0].mxu0
        %1663 = vmatprep.mubr.bf16.mxu0 0
        %1664 = vmatmul.mubr.bf16.gmra.mrb[0].mxu0 %v359
        %v1665 = vpop.f32.mrb[0].mxu0
        %v1666 = vadd.f32 %v1590, %v1665
        %v1667 = vpop.f32.mrb[0].mxu0
        %v1668 = vpop.f32.mrb[0].mxu0
        %v1669 = vadd.f32 %v1590, %v1668
        %v1670 = vpop.f32.mrb[0].mxu0
        %1671 = vmatprep.mubr.bf16.mxu0 0
        %1672 = vmatmul.mubr.bf16.gmra.mrb[0].mxu0 %v360
        %v1673 = vpop.f32.mrb[0].mxu0
        %v1674 = vadd.f32 %v1590, %v1673
        %v1675 = vpop.f32.mrb[0].mxu0
        %v1676 = vpop.f32.mrb[0].mxu0
        %v1677 = vadd.f32 %v1590, %v1676
        %v1678 = vpop.f32.mrb[0].mxu0
        %1679 = vmatprep.mubr.bf16.mxu0 0
        %1680 = vmatmul.mubr.bf16.gmra.mrb[0].mxu0 %v361
        %v1681 = vpop.f32.mrb[0].mxu0
        %v1682 = vadd.f32 %v1590, %v1681
        %v1683 = vpop.f32.mrb[0].mxu0
        %v1684 = vpop.f32.mrb[0].mxu0
        %v1685 = vadd.f32 %v1590, %v1684
        %v1686 = vpop.f32.mrb[0].mxu0
        %1687 = vdwg.mxu0
        %1688 = vadd.xlane.f32.xlu0 %v1626
        %v1689 = vpop.xlane.xlu0 %1688
        %1690 = vadd.xlane.f32.xlu0 %v1629
        %v1691 = vpop.xlane.xlu0 %1690
        %1692 = vadd.xlane.f32.xlu0 %v1634
        %v1693 = vpop.xlane.xlu0 %1692
        %1694 = vadd.xlane.f32.xlu0 %v1637
        %v1695 = vpop.xlane.xlu0 %1694
        %1696 = vadd.xlane.f32.xlu0 %v1642
        %v1697 = vpop.xlane.xlu0 %1696
        %1698 = vadd.xlane.f32.xlu0 %v1645
        %v1699 = vpop.xlane.xlu0 %1698
        %1700 = vadd.xlane.f32.xlu0 %v1650
        %v1701 = vpop.xlane.xlu0 %1700
        %1702 = vadd.xlane.f32.xlu0 %v1653
        %v1703 = vpop.xlane.xlu0 %1702
        %1704 = vadd.xlane.f32.xlu0 %v1658
        %v1705 = vpop.xlane.xlu0 %1704
        %1706 = vadd.xlane.f32.xlu0 %v1661
        %v1707 = vpop.xlane.xlu0 %1706
        %1708 = vadd.xlane.f32.xlu0 %v1666
        %v1709 = vpop.xlane.xlu0 %1708
        %1710 = vadd.xlane.f32.xlu0 %v1669
        %v1711 = vpop.xlane.xlu0 %1710
        %1712 = vadd.xlane.f32.xlu0 %v1674
        %v1713 = vpop.xlane.xlu0 %1712
        %1714 = vadd.xlane.f32.xlu0 %v1677
        %v1715 = vpop.xlane.xlu0 %1714
        %1716 = vadd.xlane.f32.xlu0 %v1682
        %v1717 = vpop.xlane.xlu0 %1716
        %1718 = vadd.xlane.f32.xlu0 %v1685
        %v1719 = vpop.xlane.xlu0 %1718
        %v1720 = vmul.f32 %v1689, %v694
        %v1721 = vmul.f32 %v1691, %v694
        %v1722 = vmul.f32 %v1693, %v694
        %v1723 = vmul.f32 %v1695, %v694
        %v1724 = vmul.f32 %v1697, %v694
        %v1725 = vmul.f32 %v1699, %v694
        %v1726 = vmul.f32 %v1701, %v694
        %v1727 = vmul.f32 %v1703, %v694
        %v1728 = vmul.f32 %v1705, %v694
        %v1729 = vmul.f32 %v1707, %v694
        %v1730 = vmul.f32 %v1709, %v694
        %v1731 = vmul.f32 %v1711, %v694
        %v1732 = vmul.f32 %v1713, %v694
        %v1733 = vmul.f32 %v1715, %v694
        %v1734 = vmul.f32 %v1717, %v694
        %v1735 = vmul.f32 %v1719, %v694
        %v1736 = vsub.f32 %v1626, %v1720
        %v1737 = vsub.f32 %v1629, %v1721
        %v1738 = vsub.f32 %v1634, %v1722
        %v1739 = vsub.f32 %v1637, %v1723
        %v1740 = vsub.f32 %v1642, %v1724
        %v1741 = vsub.f32 %v1645, %v1725
        %v1742 = vsub.f32 %v1650, %v1726
        %v1743 = vsub.f32 %v1653, %v1727
        %v1744 = vsub.f32 %v1658, %v1728
        %v1745 = vsub.f32 %v1661, %v1729
        %v1746 = vsub.f32 %v1666, %v1730
        %v1747 = vsub.f32 %v1669, %v1731
        %v1748 = vsub.f32 %v1674, %v1732
        %v1749 = vsub.f32 %v1677, %v1733
        %v1750 = vsub.f32 %v1682, %v1734
        %v1751 = vsub.f32 %v1685, %v1735
        %v1752 = vmul.f32 %v1736, %v1736
        %v1753 = vmul.f32 %v1737, %v1737
        %v1754 = vmul.f32 %v1738, %v1738
        %v1755 = vmul.f32 %v1739, %v1739
        %v1756 = vmul.f32 %v1740, %v1740
        %v1757 = vmul.f32 %v1741, %v1741
        %v1758 = vmul.f32 %v1742, %v1742
        %v1759 = vmul.f32 %v1743, %v1743
        %v1760 = vmul.f32 %v1744, %v1744
        %v1761 = vmul.f32 %v1745, %v1745
        %v1762 = vmul.f32 %v1746, %v1746
        %v1763 = vmul.f32 %v1747, %v1747
        %v1764 = vmul.f32 %v1748, %v1748
        %v1765 = vmul.f32 %v1749, %v1749
        %v1766 = vmul.f32 %v1750, %v1750
        %v1767 = vmul.f32 %v1751, %v1751
        %1768 = vadd.xlane.f32.xlu0 %v1752
        %v1769 = vpop.xlane.xlu0 %1768
        %1770 = vadd.xlane.f32.xlu0 %v1753
        %v1771 = vpop.xlane.xlu0 %1770
        %1772 = vadd.xlane.f32.xlu0 %v1754
        %v1773 = vpop.xlane.xlu0 %1772
        %1774 = vadd.xlane.f32.xlu0 %v1755
        %v1775 = vpop.xlane.xlu0 %1774
        %1776 = vadd.xlane.f32.xlu0 %v1756
        %v1777 = vpop.xlane.xlu0 %1776
        %1778 = vadd.xlane.f32.xlu0 %v1757
        %v1779 = vpop.xlane.xlu0 %1778
        %1780 = vadd.xlane.f32.xlu0 %v1758
        %v1781 = vpop.xlane.xlu0 %1780
        %1782 = vadd.xlane.f32.xlu0 %v1759
        %v1783 = vpop.xlane.xlu0 %1782
        %1784 = vadd.xlane.f32.xlu0 %v1760
        %v1785 = vpop.xlane.xlu0 %1784
        %1786 = vadd.xlane.f32.xlu0 %v1761
        %v1787 = vpop.xlane.xlu0 %1786
        %1788 = vadd.xlane.f32.xlu0 %v1762
        %v1789 = vpop.xlane.xlu0 %1788
        %1790 = vadd.xlane.f32.xlu0 %v1763
        %v1791 = vpop.xlane.xlu0 %1790
        %1792 = vadd.xlane.f32.xlu0 %v1764
        %v1793 = vpop.xlane.xlu0 %1792
        %1794 = vadd.xlane.f32.xlu0 %v1765
        %v1795 = vpop.xlane.xlu0 %1794
        %1796 = vadd.xlane.f32.xlu0 %v1766
        %v1797 = vpop.xlane.xlu0 %1796
        %1798 = vadd.xlane.f32.xlu0 %v1767
        %v1799 = vpop.xlane.xlu0 %1798
        %v1800 = vmul.f32 %v1769, %v694
        %v1801 = vmul.f32 %v1771, %v694
        %v1802 = vmul.f32 %v1773, %v694
        %v1803 = vmul.f32 %v1775, %v694
        %v1804 = vmul.f32 %v1777, %v694
        %v1805 = vmul.f32 %v1779, %v694
        %v1806 = vmul.f32 %v1781, %v694
        %v1807 = vmul.f32 %v1783, %v694
        %v1808 = vmul.f32 %v1785, %v694
        %v1809 = vmul.f32 %v1787, %v694
        %v1810 = vmul.f32 %v1789, %v694
        %v1811 = vmul.f32 %v1791, %v694
        %v1812 = vmul.f32 %v1793, %v694
        %v1813 = vmul.f32 %v1795, %v694
        %v1814 = vmul.f32 %v1797, %v694
        %v1815 = vmul.f32 %v1799, %v694
        %v1816 = vadd.f32 %v1800, 1e-05
        %v1817 = vadd.f32 %v1801, 1e-05
        %v1818 = vadd.f32 %v1802, 1e-05
        %v1819 = vadd.f32 %v1803, 1e-05
        %v1820 = vadd.f32 %v1804, 1e-05
        %v1821 = vadd.f32 %v1805, 1e-05
        %v1822 = vadd.f32 %v1806, 1e-05
        %v1823 = vadd.f32 %v1807, 1e-05
        %v1824 = vadd.f32 %v1808, 1e-05
        %v1825 = vadd.f32 %v1809, 1e-05
        %v1826 = vadd.f32 %v1810, 1e-05
        %v1827 = vadd.f32 %v1811, 1e-05
        %v1828 = vadd.f32 %v1812, 1e-05
        %v1829 = vadd.f32 %v1813, 1e-05
        %v1830 = vadd.f32 %v1814, 1e-05
        %v1831 = vadd.f32 %v1815, 1e-05
        %v1832 = vrsqrt.pop %v1816
        %v1833 = vrsqrt.pop %v1817
        %v1834 = vrsqrt.pop %v1818
        %v1835 = vrsqrt.pop %v1819
        %v1836 = vrsqrt.pop %v1820
        %v1837 = vrsqrt.pop %v1821
        %v1838 = vrsqrt.pop %v1822
        %v1839 = vrsqrt.pop %v1823
        %v1840 = vrsqrt.pop %v1824
        %v1841 = vrsqrt.pop %v1825
        %v1842 = vrsqrt.pop %v1826
        %v1843 = vrsqrt.pop %v1827
        %v1844 = vrsqrt.pop %v1828
        %v1845 = vrsqrt.pop %v1829
        %v1846 = vrsqrt.pop %v1830
        %v1847 = vrsqrt.pop %v1831
        %v1848 = vmul.f32 %v1736, %v1832
        %v1849 = vmul.f32 %v1737, %v1833
        %v1850 = vmul.f32 %v1738, %v1834
        %v1851 = vmul.f32 %v1739, %v1835
        %v1852 = vmul.f32 %v1740, %v1836
        %v1853 = vmul.f32 %v1741, %v1837
        %v1854 = vmul.f32 %v1742, %v1838
        %v1855 = vmul.f32 %v1743, %v1839
        %v1856 = vmul.f32 %v1744, %v1840
        %v1857 = vmul.f32 %v1745, %v1841
        %v1858 = vmul.f32 %v1746, %v1842
        %v1859 = vmul.f32 %v1747, %v1843
        %v1860 = vmul.f32 %v1748, %v1844
        %v1861 = vmul.f32 %v1749, %v1845
        %v1862 = vmul.f32 %v1750, %v1846
        %v1863 = vmul.f32 %v1751, %v1847
        %v1864 = vlaneseq
        %v1865 = vshrl.u32 %v1864, 7
        %v1866 = vsub.s32 1, %v1865
        %v1867 = vrot.slane %v1586, %v1866
        %v1868 = vmul.f32 %v1848, %v1867
        %v1869 = vmul.f32 %v1849, %v1867
        %v1870 = vmul.f32 %v1850, %v1867
        %v1871 = vmul.f32 %v1851, %v1867
        %v1872 = vmul.f32 %v1852, %v1867
        %v1873 = vmul.f32 %v1853, %v1867
        %v1874 = vmul.f32 %v1854, %v1867
        %v1875 = vmul.f32 %v1855, %v1867
        %v1876 = vmul.f32 %v1856, %v1867
        %v1877 = vmul.f32 %v1857, %v1867
        %v1878 = vmul.f32 %v1858, %v1867
        %v1879 = vmul.f32 %v1859, %v1867
        %v1880 = vmul.f32 %v1860, %v1867
        %v1881 = vmul.f32 %v1861, %v1867
        %v1882 = vmul.f32 %v1862, %v1867
        %v1883 = vmul.f32 %v1863, %v1867
        %v1884 = vlaneseq
        %v1885 = vshrl.u32 %v1884, 7
        %v1886 = vsub.s32 2, %v1885
        %v1887 = vrot.slane %v1586, %v1886
        %v1888 = vadd.f32 %v1868, %v1887
        %v1889 = vadd.f32 %v1869, %v1887
        %v1890 = vadd.f32 %v1870, %v1887
        %v1891 = vadd.f32 %v1871, %v1887
        %v1892 = vadd.f32 %v1872, %v1887
        %v1893 = vadd.f32 %v1873, %v1887
        %v1894 = vadd.f32 %v1874, %v1887
        %v1895 = vadd.f32 %v1875, %v1887
        %v1896 = vadd.f32 %v1876, %v1887
        %v1897 = vadd.f32 %v1877, %v1887
        %v1898 = vadd.f32 %v1878, %v1887
        %v1899 = vadd.f32 %v1879, %v1887
        %v1900 = vadd.f32 %v1880, %v1887
        %v1901 = vadd.f32 %v1881, %v1887
        %v1902 = vadd.f32 %v1882, %v1887
        %v1903 = vadd.f32 %v1883, %v1887
        %v1904 = vmax.f32 %v1888, 0.0
        %v1905 = vmax.f32 %v1889, 0.0
        %v1906 = vmax.f32 %v1890, 0.0
        %v1907 = vmax.f32 %v1891, 0.0
        %v1908 = vmax.f32 %v1892, 0.0
        %v1909 = vmax.f32 %v1893, 0.0
        %v1910 = vmax.f32 %v1894, 0.0
        %v1911 = vmax.f32 %v1895, 0.0
        %v1912 = vmax.f32 %v1896, 0.0
        %v1913 = vmax.f32 %v1897, 0.0
        %v1914 = vmax.f32 %v1898, 0.0
        %v1915 = vmax.f32 %v1899, 0.0
        %v1916 = vmax.f32 %v1900, 0.0
        %v1917 = vmax.f32 %v1901, 0.0
        %v1918 = vmax.f32 %v1902, 0.0
        %v1919 = vmax.f32 %v1903, 0.0
        %s1920 = scalar_lea.vmem [#allocation3], 128
        %v1921 = vld [vmem:[%s1920] sm:$0xf]
        %v1922 = vld [vmem:[%s1920 + $0x4] sm:$0xf]
        %v1923 = vld [vmem:[%s1920 + $0x8] sm:$0xf]
        %v1924 = vld [vmem:[%s1920 + $0xc] sm:$0xf]
        %v1925 = vld [vmem:[%s1920 + $0x10] sm:$0xf]
        %v1926 = vld [vmem:[%s1920 + $0x14] sm:$0xf]
        %v1927 = vld [vmem:[%s1920 + $0x18] sm:$0xf]
        %v1928 = vld [vmem:[%s1920 + $0x1c] sm:$0xf]
        %v1929 = vld [vmem:[%s1920 + $0x20] sm:$0xf]
        %v1930 = vld [vmem:[%s1920 + $0x24] sm:$0xf]
        %v1931 = vld [vmem:[%s1920 + $0x28] sm:$0xf]
        %v1932 = vld [vmem:[%s1920 + $0x2c] sm:$0xf]
        %v1933 = vld [vmem:[%s1920 + $0x30] sm:$0xf]
        %v1934 = vld [vmem:[%s1920 + $0x34] sm:$0xf]
        %v1935 = vld [vmem:[%s1920 + $0x38] sm:$0xf]
        %v1936 = vld [vmem:[%s1920 + $0x3c] sm:$0xf]
        %v1937 = vpack.c.bf16 %v1905, %v1904
        %v1938 = vpack.c.bf16 %v1907, %v1906
        %v1939 = vpack.c.bf16 %v1909, %v1908
        %v1940 = vpack.c.bf16 %v1911, %v1910
        %v1941 = vpack.c.bf16 %v1913, %v1912
        %v1942 = vpack.c.bf16 %v1915, %v1914
        %v1943 = vpack.c.bf16 %v1917, %v1916
        %v1944 = vpack.c.bf16 %v1919, %v1918
        %v1961 = vunpack.c.l.b16 %v1921
        %v1962 = vunpack.c.l.b16 %v1922
        %v1963 = vunpack.c.l.b16 %v1923
        %v1964 = vunpack.c.l.b16 %v1924
        %v1965 = vunpack.c.l.b16 %v1925
        %v1966 = vunpack.c.l.b16 %v1926
        %v1967 = vunpack.c.l.b16 %v1927
        %v1968 = vunpack.c.l.b16 %v1928
        %v1969 = vunpack.c.l.b16 %v1929
        %v1970 = vunpack.c.l.b16 %v1930
        %v1971 = vunpack.c.l.b16 %v1931
        %v1972 = vunpack.c.l.b16 %v1932
        %v1973 = vunpack.c.l.b16 %v1933
        %v1974 = vunpack.c.l.b16 %v1934
        %v1975 = vunpack.c.l.b16 %v1935
        %v1976 = vunpack.c.l.b16 %v1936
        %v1977 = vpack.c.b16 %v1962, %v1961
        %v1978 = vpack.c.b16 %v1964, %v1963
        %v1979 = vpack.c.b16 %v1966, %v1965
        %v1980 = vpack.c.b16 %v1968, %v1967
        %v1981 = vpack.c.b16 %v1970, %v1969
        %v1982 = vpack.c.b16 %v1972, %v1971
        %v1983 = vpack.c.b16 %v1974, %v1973
        %v1984 = vpack.c.b16 %v1976, %v1975
        %1993 = vmatprep.subr.bf16.mxu0 0
        %1994 = vmatpush1.bf16.msra.mxu0 %v1977
        %1995 = vmatprep.subr.bf16.mxu0 0
        %1996 = vmatpush1.bf16.msra.mxu0 %v1978
        %1997 = vmatprep.subr.bf16.mxu0 0
        %1998 = vmatpush1.bf16.msra.mxu0 %v1979
        %1999 = vmatprep.subr.bf16.mxu0 0
        %2000 = vmatpush1.bf16.msra.mxu0 %v1980
        %2001 = vmatprep.subr.bf16.mxu0 0
        %2002 = vmatpush1.bf16.msra.mxu0 %v1981
        %2003 = vmatprep.subr.bf16.mxu0 0
        %2004 = vmatpush1.bf16.msra.mxu0 %v1982
        %2005 = vmatprep.subr.bf16.mxu0 0
        %2006 = vmatpush1.bf16.msra.mxu0 %v1983
        %2007 = vmatprep.subr.bf16.mxu0 0
        %2008 = vmatpush1.bf16.msra.mxu0 %v1984
        %2009 = vmatprep.subr.bf16.mxu0 0
        %2010 = vmatpush1.bf16.msra.mxu0 0
        %2011 = vmatprep.subr.bf16.mxu0 0
        %2012 = vmatpush1.bf16.msra.mxu0 0
        %2013 = vmatprep.subr.bf16.mxu0 0
        %2014 = vmatpush1.bf16.msra.mxu0 0
        %2015 = vmatprep.subr.bf16.mxu0 0
        %2016 = vmatpush1.bf16.msra.mxu0 0
        %2017 = vmatprep.subr.bf16.mxu0 0
        %2018 = vmatpush1.bf16.msra.mxu0 0
        %2019 = vmatprep.subr.bf16.mxu0 0
        %2020 = vmatpush1.bf16.msra.mxu0 0
        %2021 = vmatprep.subr.bf16.mxu0 0
        %2022 = vmatpush1.bf16.msra.mxu0 0
        %2023 = vmatprep.subr.bf16.mxu0 0
        %2024 = vmatpush1.bf16.msra.mxu0 0
        %2025 = vmatprep.mubr.bf16.mxu0 0
        %2026 = vmatmul.mubr.bf16.gmra.mrb[0].mxu0 %v1937
        %v2027 = vpop.f32.mrb[0].mxu0
        %v2028 = vadd.f32 0.0, %v2027
        %v2029 = vpop.f32.mrb[0].mxu0
        %v2030 = vpop.f32.mrb[0].mxu0
        %v2031 = vadd.f32 0.0, %v2030
        %v2032 = vpop.f32.mrb[0].mxu0
        %2033 = vmatprep.mubr.bf16.mxu0 0
        %2034 = vmatmul.mubr.bf16.gmra.mrb[0].mxu0 %v1938
        %v2035 = vpop.f32.mrb[0].mxu0
        %v2036 = vadd.f32 0.0, %v2035
        %v2037 = vpop.f32.mrb[0].mxu0
        %v2038 = vpop.f32.mrb[0].mxu0
        %v2039 = vadd.f32 0.0, %v2038
        %v2040 = vpop.f32.mrb[0].mxu0
        %2041 = vmatprep.mubr.bf16.mxu0 0
        %2042 = vmatmul.mubr.bf16.gmra.mrb[0].mxu0 %v1939
        %v2043 = vpop.f32.mrb[0].mxu0
        %v2044 = vadd.f32 0.0, %v2043
        %v2045 = vpop.f32.mrb[0].mxu0
        %v2046 = vpop.f32.mrb[0].mxu0
        %v2047 = vadd.f32 0.0, %v2046
        %v2048 = vpop.f32.mrb[0].mxu0
        %2049 = vmatprep.mubr.bf16.mxu0 0
        %2050 = vmatmul.mubr.bf16.gmra.mrb[0].mxu0 %v1940
        %v2051 = vpop.f32.mrb[0].mxu0
        %v2052 = vadd.f32 0.0, %v2051
        %v2053 = vpop.f32.mrb[0].mxu0
        %v2054 = vpop.f32.mrb[0].mxu0
        %v2055 = vadd.f32 0.0, %v2054
        %v2056 = vpop.f32.mrb[0].mxu0
        %2057 = vmatprep.mubr.bf16.mxu0 0
        %2058 = vmatmul.mubr.bf16.gmra.mrb[0].mxu0 %v1941
        %v2059 = vpop.f32.mrb[0].mxu0
        %v2060 = vadd.f32 0.0, %v2059
        %v2061 = vpop.f32.mrb[0].mxu0
        %v2062 = vpop.f32.mrb[0].mxu0
        %v2063 = vadd.f32 0.0, %v2062
        %v2064 = vpop.f32.mrb[0].mxu0
        %2065 = vmatprep.mubr.bf16.mxu0 0
        %2066 = vmatmul.mubr.bf16.gmra.mrb[0].mxu0 %v1942
        %v2067 = vpop.f32.mrb[0].mxu0
        %v2068 = vadd.f32 0.0, %v2067
        %v2069 = vpop.f32.mrb[0].mxu0
        %v2070 = vpop.f32.mrb[0].mxu0
        %v2071 = vadd.f32 0.0, %v2070
        %v2072 = vpop.f32.mrb[0].mxu0
        %2073 = vmatprep.mubr.bf16.mxu0 0
        %2074 = vmatmul.mubr.bf16.gmra.mrb[0].mxu0 %v1943
        %v2075 = vpop.f32.mrb[0].mxu0
        %v2076 = vadd.f32 0.0, %v2075
        %v2077 = vpop.f32.mrb[0].mxu0
        %v2078 = vpop.f32.mrb[0].mxu0
        %v2079 = vadd.f32 0.0, %v2078
        %v2080 = vpop.f32.mrb[0].mxu0
        %2081 = vmatprep.mubr.bf16.mxu0 0
        %2082 = vmatmul.mubr.bf16.gmra.mrb[0].mxu0 %v1944
        %v2083 = vpop.f32.mrb[0].mxu0
        %v2084 = vadd.f32 0.0, %v2083
        %v2085 = vpop.f32.mrb[0].mxu0
        %v2086 = vpop.f32.mrb[0].mxu0
        %v2087 = vadd.f32 0.0, %v2086
        %v2088 = vpop.f32.mrb[0].mxu0
        %2089 = vdwg.mxu0
        %v2090 = vpack.c.bf16 %v2031, %v2028
        %v2091 = vpack.c.bf16 %v2039, %v2036
        %v2092 = vpack.c.bf16 %v2047, %v2044
        %v2093 = vpack.c.bf16 %v2055, %v2052
        %v2094 = vpack.c.bf16 %v2063, %v2060
        %v2095 = vpack.c.bf16 %v2071, %v2068
        %v2096 = vpack.c.bf16 %v2079, %v2076
        %v2097 = vpack.c.bf16 %v2087, %v2084
        %s2098 = scalar_lea.vmem %s4, 12
        %v2099 = vld [vmem:[%s2098] sm:$0x7]
        %v2100 = vlaneseq
        %v2101 = vshrl.u32 %v2100, 7
        %v2102 = vsub.s32 0, %v2101
        %v2103 = vrot.slane %v2099, %v2102
        %2104 = vmatprep.subr.bf16.mxu0 0
        %2105 = vmatpush1.bf16.msra.mxu0 %v2090
        %2106 = vmatprep.subr.bf16.mxu0 0
        %2107 = vmatpush1.bf16.msra.mxu0 %v2091
        %2108 = vmatprep.subr.bf16.mxu0 0
        %2109 = vmatpush1.bf16.msra.mxu0 %v2092
        %2110 = vmatprep.subr.bf16.mxu0 0
        %2111 = vmatpush1.bf16.msra.mxu0 %v2093
        %2112 = vmatprep.subr.bf16.mxu0 0
        %2113 = vmatpush1.bf16.msra.mxu0 %v2094
        %2114 = vmatprep.subr.bf16.mxu0 0
        %2115 = vmatpush1.bf16.msra.mxu0 %v2095
        %2116 = vmatprep.subr.bf16.mxu0 0
        %2117 = vmatpush1.bf16.msra.mxu0 %v2096
        %2118 = vmatprep.subr.bf16.mxu0 0
        %2119 = vmatpush1.bf16.msra.mxu0 %v2097
        %2120 = vmatprep.subr.bf16.mxu0 0
        %2121 = vmatpush1.bf16.msra.mxu0 0
        %2122 = vmatprep.subr.bf16.mxu0 0
        %2123 = vmatpush1.bf16.msra.mxu0 0
        %2124 = vmatprep.subr.bf16.mxu0 0
        %2125 = vmatpush1.bf16.msra.mxu0 0
        %2126 = vmatprep.subr.bf16.mxu0 0
        %2127 = vmatpush1.bf16.msra.mxu0 0
        %2128 = vmatprep.subr.bf16.mxu0 0
        %2129 = vmatpush1.bf16.msra.mxu0 0
        %2130 = vmatprep.subr.bf16.mxu0 0
        %2131 = vmatpush1.bf16.msra.mxu0 0
        %2132 = vmatprep.subr.bf16.mxu0 0
        %2133 = vmatpush1.bf16.msra.mxu0 0
        %2134 = vmatprep.subr.bf16.mxu0 0
        %2135 = vmatpush1.bf16.msra.mxu0 0
        %2136 = vmatprep.mubr.bf16.mxu0 0
        %2137 = vmatmul.mubr.bf16.gmra.mrb[0].mxu0 %v354
        %v2138 = vpop.f32.mrb[0].mxu0
        %v2139 = vadd.f32 %v2103, %v2138
        %v2140 = vpop.f32.mrb[0].mxu0
        %v2141 = vpop.f32.mrb[0].mxu0
        %v2142 = vadd.f32 %v2103, %v2141
        %v2143 = vpop.f32.mrb[0].mxu0
        %2144 = vmatprep.mubr.bf16.mxu0 0
        %2145 = vmatmul.mubr.bf16.gmra.mrb[0].mxu0 %v355
        %v2146 = vpop.f32.mrb[0].mxu0
        %v2147 = vadd.f32 %v2103, %v2146
        %v2148 = vpop.f32.mrb[0].mxu0
        %v2149 = vpop.f32.mrb[0].mxu0
        %v2150 = vadd.f32 %v2103, %v2149
        %v2151 = vpop.f32.mrb[0].mxu0
        %2152 = vmatprep.mubr.bf16.mxu0 0
        %2153 = vmatmul.mubr.bf16.gmra.mrb[0].mxu0 %v356
        %v2154 = vpop.f32.mrb[0].mxu0
        %v2155 = vadd.f32 %v2103, %v2154
        %v2156 = vpop.f32.mrb[0].mxu0
        %v2157 = vpop.f32.mrb[0].mxu0
        %v2158 = vadd.f32 %v2103, %v2157
        %v2159 = vpop.f32.mrb[0].mxu0
        %2160 = vmatprep.mubr.bf16.mxu0 0
        %2161 = vmatmul.mubr.bf16.gmra.mrb[0].mxu0 %v357
        %v2162 = vpop.f32.mrb[0].mxu0
        %v2163 = vadd.f32 %v2103, %v2162
        %v2164 = vpop.f32.mrb[0].mxu0
        %v2165 = vpop.f32.mrb[0].mxu0
        %v2166 = vadd.f32 %v2103, %v2165
        %v2167 = vpop.f32.mrb[0].mxu0
        %2168 = vmatprep.mubr.bf16.mxu0 0
        %2169 = vmatmul.mubr.bf16.gmra.mrb[0].mxu0 %v358
        %v2170 = vpop.f32.mrb[0].mxu0
        %v2171 = vadd.f32 %v2103, %v2170
        %v2172 = vpop.f32.mrb[0].mxu0
        %v2173 = vpop.f32.mrb[0].mxu0
        %v2174 = vadd.f32 %v2103, %v2173
        %v2175 = vpop.f32.mrb[0].mxu0
        %2176 = vmatprep.mubr.bf16.mxu0 0
        %2177 = vmatmul.mubr.bf16.gmra.mrb[0].mxu0 %v359
        %v2178 = vpop.f32.mrb[0].mxu0
        %v2179 = vadd.f32 %v2103, %v2178
        %v2180 = vpop.f32.mrb[0].mxu0
        %v2181 = vpop.f32.mrb[0].mxu0
        %v2182 = vadd.f32 %v2103, %v2181
        %v2183 = vpop.f32.mrb[0].mxu0
        %2184 = vmatprep.mubr.bf16.mxu0 0
        %2185 = vmatmul.mubr.bf16.gmra.mrb[0].mxu0 %v360
        %v2186 = vpop.f32.mrb[0].mxu0
        %v2187 = vadd.f32 %v2103, %v2186
        %v2188 = vpop.f32.mrb[0].mxu0
        %v2189 = vpop.f32.mrb[0].mxu0
        %v2190 = vadd.f32 %v2103, %v2189
        %v2191 = vpop.f32.mrb[0].mxu0
        %2192 = vmatprep.mubr.bf16.mxu0 0
        %2193 = vmatmul.mubr.bf16.gmra.mrb[0].mxu0 %v361
        %v2194 = vpop.f32.mrb[0].mxu0
        %v2195 = vadd.f32 %v2103, %v2194
        %v2196 = vpop.f32.mrb[0].mxu0
        %v2197 = vpop.f32.mrb[0].mxu0
        %v2198 = vadd.f32 %v2103, %v2197
        %v2199 = vpop.f32.mrb[0].mxu0
        %2200 = vdwg.mxu0
        %2201 = vadd.xlane.f32.xlu0 %v2139
        %v2202 = vpop.xlane.xlu0 %2201
        %2203 = vadd.xlane.f32.xlu0 %v2142
        %v2204 = vpop.xlane.xlu0 %2203
        %2205 = vadd.xlane.f32.xlu0 %v2147
        %v2206 = vpop.xlane.xlu0 %2205
        %2207 = vadd.xlane.f32.xlu0 %v2150
        %v2208 = vpop.xlane.xlu0 %2207
        %2209 = vadd.xlane.f32.xlu0 %v2155
        %v2210 = vpop.xlane.xlu0 %2209
        %2211 = vadd.xlane.f32.xlu0 %v2158
        %v2212 = vpop.xlane.xlu0 %2211
        %2213 = vadd.xlane.f32.xlu0 %v2163
        %v2214 = vpop.xlane.xlu0 %2213
        %2215 = vadd.xlane.f32.xlu0 %v2166
        %v2216 = vpop.xlane.xlu0 %2215
        %2217 = vadd.xlane.f32.xlu0 %v2171
        %v2218 = vpop.xlane.xlu0 %2217
        %2219 = vadd.xlane.f32.xlu0 %v2174
        %v2220 = vpop.xlane.xlu0 %2219
        %2221 = vadd.xlane.f32.xlu0 %v2179
        %v2222 = vpop.xlane.xlu0 %2221
        %2223 = vadd.xlane.f32.xlu0 %v2182
        %v2224 = vpop.xlane.xlu0 %2223
        %2225 = vadd.xlane.f32.xlu0 %v2187
        %v2226 = vpop.xlane.xlu0 %2225
        %2227 = vadd.xlane.f32.xlu0 %v2190
        %v2228 = vpop.xlane.xlu0 %2227
        %2229 = vadd.xlane.f32.xlu0 %v2195
        %v2230 = vpop.xlane.xlu0 %2229
        %2231 = vadd.xlane.f32.xlu0 %v2198
        %v2232 = vpop.xlane.xlu0 %2231
        %v2233 = vmul.f32 %v2202, %v694
        %v2234 = vmul.f32 %v2204, %v694
        %v2235 = vmul.f32 %v2206, %v694
        %v2236 = vmul.f32 %v2208, %v694
        %v2237 = vmul.f32 %v2210, %v694
        %v2238 = vmul.f32 %v2212, %v694
        %v2239 = vmul.f32 %v2214, %v694
        %v2240 = vmul.f32 %v2216, %v694
        %v2241 = vmul.f32 %v2218, %v694
        %v2242 = vmul.f32 %v2220, %v694
        %v2243 = vmul.f32 %v2222, %v694
        %v2244 = vmul.f32 %v2224, %v694
        %v2245 = vmul.f32 %v2226, %v694
        %v2246 = vmul.f32 %v2228, %v694
        %v2247 = vmul.f32 %v2230, %v694
        %v2248 = vmul.f32 %v2232, %v694
        %v2249 = vsub.f32 %v2139, %v2233
        %v2250 = vsub.f32 %v2142, %v2234
        %v2251 = vsub.f32 %v2147, %v2235
        %v2252 = vsub.f32 %v2150, %v2236
        %v2253 = vsub.f32 %v2155, %v2237
        %v2254 = vsub.f32 %v2158, %v2238
        %v2255 = vsub.f32 %v2163, %v2239
        %v2256 = vsub.f32 %v2166, %v2240
        %v2257 = vsub.f32 %v2171, %v2241
        %v2258 = vsub.f32 %v2174, %v2242
        %v2259 = vsub.f32 %v2179, %v2243
        %v2260 = vsub.f32 %v2182, %v2244
        %v2261 = vsub.f32 %v2187, %v2245
        %v2262 = vsub.f32 %v2190, %v2246
        %v2263 = vsub.f32 %v2195, %v2247
        %v2264 = vsub.f32 %v2198, %v2248
        %v2265 = vmul.f32 %v2249, %v2249
        %v2266 = vmul.f32 %v2250, %v2250
        %v2267 = vmul.f32 %v2251, %v2251
        %v2268 = vmul.f32 %v2252, %v2252
        %v2269 = vmul.f32 %v2253, %v2253
        %v2270 = vmul.f32 %v2254, %v2254
        %v2271 = vmul.f32 %v2255, %v2255
        %v2272 = vmul.f32 %v2256, %v2256
        %v2273 = vmul.f32 %v2257, %v2257
        %v2274 = vmul.f32 %v2258, %v2258
        %v2275 = vmul.f32 %v2259, %v2259
        %v2276 = vmul.f32 %v2260, %v2260
        %v2277 = vmul.f32 %v2261, %v2261
        %v2278 = vmul.f32 %v2262, %v2262
        %v2279 = vmul.f32 %v2263, %v2263
        %v2280 = vmul.f32 %v2264, %v2264
        %2281 = vadd.xlane.f32.xlu0 %v2265
        %v2282 = vpop.xlane.xlu0 %2281
        %2283 = vadd.xlane.f32.xlu0 %v2266
        %v2284 = vpop.xlane.xlu0 %2283
        %2285 = vadd.xlane.f32.xlu0 %v2267
        %v2286 = vpop.xlane.xlu0 %2285
        %2287 = vadd.xlane.f32.xlu0 %v2268
        %v2288 = vpop.xlane.xlu0 %2287
        %2289 = vadd.xlane.f32.xlu0 %v2269
        %v2290 = vpop.xlane.xlu0 %2289
        %2291 = vadd.xlane.f32.xlu0 %v2270
        %v2292 = vpop.xlane.xlu0 %2291
        %2293 = vadd.xlane.f32.xlu0 %v2271
        %v2294 = vpop.xlane.xlu0 %2293
        %2295 = vadd.xlane.f32.xlu0 %v2272
        %v2296 = vpop.xlane.xlu0 %2295
        %2297 = vadd.xlane.f32.xlu0 %v2273
        %v2298 = vpop.xlane.xlu0 %2297
        %2299 = vadd.xlane.f32.xlu0 %v2274
        %v2300 = vpop.xlane.xlu0 %2299
        %2301 = vadd.xlane.f32.xlu0 %v2275
        %v2302 = vpop.xlane.xlu0 %2301
        %2303 = vadd.xlane.f32.xlu0 %v2276
        %v2304 = vpop.xlane.xlu0 %2303
        %2305 = vadd.xlane.f32.xlu0 %v2277
        %v2306 = vpop.xlane.xlu0 %2305
        %2307 = vadd.xlane.f32.xlu0 %v2278
        %v2308 = vpop.xlane.xlu0 %2307
        %2309 = vadd.xlane.f32.xlu0 %v2279
        %v2310 = vpop.xlane.xlu0 %2309
        %2311 = vadd.xlane.f32.xlu0 %v2280
        %v2312 = vpop.xlane.xlu0 %2311
        %v2313 = vmul.f32 %v2282, %v694
        %v2314 = vmul.f32 %v2284, %v694
        %v2315 = vmul.f32 %v2286, %v694
        %v2316 = vmul.f32 %v2288, %v694
        %v2317 = vmul.f32 %v2290, %v694
        %v2318 = vmul.f32 %v2292, %v694
        %v2319 = vmul.f32 %v2294, %v694
        %v2320 = vmul.f32 %v2296, %v694
        %v2321 = vmul.f32 %v2298, %v694
        %v2322 = vmul.f32 %v2300, %v694
        %v2323 = vmul.f32 %v2302, %v694
        %v2324 = vmul.f32 %v2304, %v694
        %v2325 = vmul.f32 %v2306, %v694
        %v2326 = vmul.f32 %v2308, %v694
        %v2327 = vmul.f32 %v2310, %v694
        %v2328 = vmul.f32 %v2312, %v694
        %v2329 = vadd.f32 %v2313, 1e-05
        %v2330 = vadd.f32 %v2314, 1e-05
        %v2331 = vadd.f32 %v2315, 1e-05
        %v2332 = vadd.f32 %v2316, 1e-05
        %v2333 = vadd.f32 %v2317, 1e-05
        %v2334 = vadd.f32 %v2318, 1e-05
        %v2335 = vadd.f32 %v2319, 1e-05
        %v2336 = vadd.f32 %v2320, 1e-05
        %v2337 = vadd.f32 %v2321, 1e-05
        %v2338 = vadd.f32 %v2322, 1e-05
        %v2339 = vadd.f32 %v2323, 1e-05
        %v2340 = vadd.f32 %v2324, 1e-05
        %v2341 = vadd.f32 %v2325, 1e-05
        %v2342 = vadd.f32 %v2326, 1e-05
        %v2343 = vadd.f32 %v2327, 1e-05
        %v2344 = vadd.f32 %v2328, 1e-05
        %v2345 = vrsqrt.pop %v2329
        %v2346 = vrsqrt.pop %v2330
        %v2347 = vrsqrt.pop %v2331
        %v2348 = vrsqrt.pop %v2332
        %v2349 = vrsqrt.pop %v2333
        %v2350 = vrsqrt.pop %v2334
        %v2351 = vrsqrt.pop %v2335
        %v2352 = vrsqrt.pop %v2336
        %v2353 = vrsqrt.pop %v2337
        %v2354 = vrsqrt.pop %v2338
        %v2355 = vrsqrt.pop %v2339
        %v2356 = vrsqrt.pop %v2340
        %v2357 = vrsqrt.pop %v2341
        %v2358 = vrsqrt.pop %v2342
        %v2359 = vrsqrt.pop %v2343
        %v2360 = vrsqrt.pop %v2344
        %v2361 = vmul.f32 %v2249, %v2345
        %v2362 = vmul.f32 %v2250, %v2346
        %v2363 = vmul.f32 %v2251, %v2347
        %v2364 = vmul.f32 %v2252, %v2348
        %v2365 = vmul.f32 %v2253, %v2349
        %v2366 = vmul.f32 %v2254, %v2350
        %v2367 = vmul.f32 %v2255, %v2351
        %v2368 = vmul.f32 %v2256, %v2352
        %v2369 = vmul.f32 %v2257, %v2353
        %v2370 = vmul.f32 %v2258, %v2354
        %v2371 = vmul.f32 %v2259, %v2355
        %v2372 = vmul.f32 %v2260, %v2356
        %v2373 = vmul.f32 %v2261, %v2357
        %v2374 = vmul.f32 %v2262, %v2358
        %v2375 = vmul.f32 %v2263, %v2359
        %v2376 = vmul.f32 %v2264, %v2360
        %v2377 = vlaneseq
        %v2378 = vshrl.u32 %v2377, 7
        %v2379 = vsub.s32 1, %v2378
        %v2380 = vrot.slane %v2099, %v2379
        %v2381 = vmul.f32 %v2361, %v2380
        %v2382 = vmul.f32 %v2362, %v2380
        %v2383 = vmul.f32 %v2363, %v2380
        %v2384 = vmul.f32 %v2364, %v2380
        %v2385 = vmul.f32 %v2365, %v2380
        %v2386 = vmul.f32 %v2366, %v2380
        %v2387 = vmul.f32 %v2367, %v2380
        %v2388 = vmul.f32 %v2368, %v2380
        %v2389 = vmul.f32 %v2369, %v2380
        %v2390 = vmul.f32 %v2370, %v2380
        %v2391 = vmul.f32 %v2371, %v2380
        %v2392 = vmul.f32 %v2372, %v2380
        %v2393 = vmul.f32 %v2373, %v2380
        %v2394 = vmul.f32 %v2374, %v2380
        %v2395 = vmul.f32 %v2375, %v2380
        %v2396 = vmul.f32 %v2376, %v2380
        %v2397 = vlaneseq
        %v2398 = vshrl.u32 %v2397, 7
        %v2399 = vsub.s32 2, %v2398
        %v2400 = vrot.slane %v2099, %v2399
        %v2401 = vadd.f32 %v2381, %v2400
        %v2402 = vadd.f32 %v2382, %v2400
        %v2403 = vadd.f32 %v2383, %v2400
        %v2404 = vadd.f32 %v2384, %v2400
        %v2405 = vadd.f32 %v2385, %v2400
        %v2406 = vadd.f32 %v2386, %v2400
        %v2407 = vadd.f32 %v2387, %v2400
        %v2408 = vadd.f32 %v2388, %v2400
        %v2409 = vadd.f32 %v2389, %v2400
        %v2410 = vadd.f32 %v2390, %v2400
        %v2411 = vadd.f32 %v2391, %v2400
        %v2412 = vadd.f32 %v2392, %v2400
        %v2413 = vadd.f32 %v2393, %v2400
        %v2414 = vadd.f32 %v2394, %v2400
        %v2415 = vadd.f32 %v2395, %v2400
        %v2416 = vadd.f32 %v2396, %v2400
        %v2417 = vmax.f32 %v2401, 0.0
        %v2418 = vmax.f32 %v2402, 0.0
        %v2419 = vmax.f32 %v2403, 0.0
        %v2420 = vmax.f32 %v2404, 0.0
        %v2421 = vmax.f32 %v2405, 0.0
        %v2422 = vmax.f32 %v2406, 0.0
        %v2423 = vmax.f32 %v2407, 0.0
        %v2424 = vmax.f32 %v2408, 0.0
        %v2425 = vmax.f32 %v2409, 0.0
        %v2426 = vmax.f32 %v2410, 0.0
        %v2427 = vmax.f32 %v2411, 0.0
        %v2428 = vmax.f32 %v2412, 0.0
        %v2429 = vmax.f32 %v2413, 0.0
        %v2430 = vmax.f32 %v2414, 0.0
        %v2431 = vmax.f32 %v2415, 0.0
        %v2432 = vmax.f32 %v2416, 0.0
        %s2433 = sld [smem:[#allocation2]]
        %s2434 = smul.f32 %s2433, 0.0078125
        %v2435 = vadd.f32 %v2417, %v2418
        %v2436 = vadd.f32 %v2435, %v2419
        %v2437 = vadd.f32 %v2436, %v2420
        %v2438 = vadd.f32 %v2437, %v2421
        %v2439 = vadd.f32 %v2438, %v2422
        %v2440 = vadd.f32 %v2439, %v2423
        %v2441 = vadd.f32 %v2440, %v2424
        %v2442 = vadd.f32 %v2441, %v2425
        %v2443 = vadd.f32 %v2442, %v2426
        %v2444 = vadd.f32 %v2443, %v2427
        %v2445 = vadd.f32 %v2444, %v2428
        %v2446 = vadd.f32 %v2445, %v2429
        %v2447 = vadd.f32 %v2446, %v2430
        %v2448 = vadd.f32 %v2447, %v2431
        %v2449 = vadd.f32 %v2448, %v2432
        %v2450 = vrot.slane %v2449, 4
        %v2451 = vadd.f32 %v2449, %v2450
        %v2452 = vrot.slane %v2451, 2
        %v2453 = vadd.f32 %v2451, %v2452
        %v2454 = vrot.slane %v2453, 1
        %v2455 = vadd.f32 %v2453, %v2454
        %v2456 = vstv %s2434
        %v2457 = vmul.f32 %v2455, %v2456
        %2458 = vst [vmem:[%s274] sm:$0x1] %v2457
        %s2459 = sand.u32 %s166, 1
        %s2460 = scalar_lea.sflag [#allocation5], %s2459
        %s2461 = sand.u32 %s166, 1
        %s2462 = scalar_lea.vmem [#allocation6], %s2461
        // Predicated region
        $region49: #{tpu_custom_call.1} parent=43 // pred_check
          %p2463 = pneg %p176
        $region50: #{tpu_custom_call.1} parent=43 // pred_check_branch
          %2465 = sbr.rel (%p2463) target = $region52
        $region51: #{tpu_custom_call.1} parent=43 // pred_region
          %s2467 = ssub.s32 16, 16
          %2468 = vsyncadd %s2460, %s2467
          %s2469 = smul.addr %s22, 16
          %s2470 = scalar_lea.hbm %s6, %s2469
          %s2472 = sshll.u32 %s2462, 4
          %s2473 = int_to_ptr.vmem [resolvable:$true] %s2472
          %2475 = dma.vmem_to_hbm [thread:$0]  %s2473, 16, %s2470, %s2460
        $region52: #{tpu_custom_call.1} parent=43 // pred_fallthru
          _
      $region44: #{tpu_custom_call.1} parent=5 // pred_fallthru
        _
      %p2476 = scmp.le.s32.totalorder 2, %s17
      // Predicated region
      $region53: #{tpu_custom_call.1} parent=5 // pred_check
        %p2477 = pneg %p2476
      $region54: #{tpu_custom_call.1} parent=5 // pred_check_branch
        %2479 = sbr.rel (%p2477) target = $region56
      $region55: #{tpu_custom_call.1} parent=5 // pred_region
        %s2480 = ssub.s32 %s17, 2
        // Predicated region
        $region57: #{tpu_custom_call.1} parent=55 // pred_check
          %p2481 = pneg %p182
        $region58: #{tpu_custom_call.1} parent=55 // pred_check_branch
          %2483 = sbr.rel (%p2481) target = $region60
        $region59: #{tpu_custom_call.1} parent=55 // pred_region
          %s2484 = sand.u32 %s167, 1
          %s2485 = scalar_lea.sflag [#allocation5], %s2484
          %s2486 = sand.u32 %s167, 1
          %s2487 = scalar_lea.vmem [#allocation6], %s2486
          %2488 = dma.done %s2485, 16
        $region60: #{tpu_custom_call.1} parent=55 // pred_fallthru
          _
      $region56: #{tpu_custom_call.1} parent=5 // pred_fallthru
        _
    $region6: #{tpu_custom_call.1} parent=1 // loop_footer
      %s21 = sadd.s32 1, %s17
    $region7: #{tpu_custom_call.1} parent=1 // loop_footer_branch
      %16 = sbr.rel target = $region3
    $region8: #{tpu_custom_call.1} parent=1 // loop_exit
      _
    %2489 = vsyncpa [#allocation4], 1
    %s2490 = scalar_lea.sflag [#allocation4], 1
    %2491 = vsyncpa %s2490, 1
    %2492 = vsyncpa [#allocation5], 1
    %s2493 = scalar_lea.sflag [#allocation5], 1
    %2494 = vsyncpa %s2493, 1

</llo_original>
